<compile_context>
chip_gen: v5e
topology: v5e:2x2
jax: 0.10.0
libtpu: 0.0.40
codegen_flags: <defaults>
</compile_context>

<pallas_src>
import functools

import jax
import jax.numpy as jnp
from jax import tree_util
from jax.experimental import pallas as pl
from jax.experimental.pallas import tpu as pltpu

HIDDEN_DIMS = [32, 64, 128, 256, 512]
LATENT_DIM = 16
IN_CHANNELS = 3
NEG_SLOPE = 0.01          # PyTorch LeakyReLU default
BN_EPS = 1e-5
MAX_TK = 2304             # largest contraction block kept resident per grid step
VMEM_LIMIT = 32 * 1024 * 1024


def _round_up(x, m):
    return ((x + m - 1) // m) * m


def _apply_act(y, act, neg=NEG_SLOPE):
    if act == "leaky_relu":
        return jnp.where(y >= 0, y, neg * y)
    if act == "tanh":
        return jnp.tanh(y)
    return y


# ----------------------------------------------------------------------------
# Pallas kernels: fused matmul + folded-BN scale/shift + activation epilogue
# ----------------------------------------------------------------------------
def _epilogue(y, scale, shift, act, neg):
    y = y * scale + shift
    if act == "leaky_relu":
        y = jnp.where(y >= 0, y, neg * y)
    elif act == "tanh":
        y = jnp.tanh(y)
    return y


def _mm_kernel_accum(a_ref, b_ref, scale_ref, shift_ref, o_ref, acc_ref,
                     *, act, neg):
    """bf16 A/B, f32 scratch accumulator, bf16 (or other) output."""
    k = pl.program_id(2)

    @pl.when(k == 0)
    def _():
        acc_ref[...] = jnp.zeros_like(acc_ref)

    acc_ref[...] += jnp.dot(a_ref[...], b_ref[...],
                            preferred_element_type=jnp.float32)

    @pl.when(k == pl.num_programs(2) - 1)
    def _():
        y = _epilogue(acc_ref[...], scale_ref[...], shift_ref[...], act, neg)
        o_ref[...] = y.astype(o_ref.dtype)


def _mm_kernel_inplace(a_ref, b_ref, scale_ref, shift_ref, o_ref, *, act, neg):
    """f32 output: accumulate directly into the resident output block."""
    k = pl.program_id(2)

    @pl.when(k == 0)
    def _():
        o_ref[...] = jnp.zeros_like(o_ref)

    o_ref[...] += jnp.dot(a_ref[...], b_ref[...],
                          preferred_element_type=jnp.float32)

    @pl.when(k == pl.num_programs(2) - 1)
    def _():
        o_ref[...] = _epilogue(o_ref[...], scale_ref[...], shift_ref[...],
                               act, neg)


# ----------------------------------------------------------------------------
# Pre-packed weights (one-time) + fused matmul wrapper
# ----------------------------------------------------------------------------
@tree_util.register_pytree_node_class
class PackedWeight:
    """Pre-padded bf16 (Kp, Np) weight + f32 (1, Np) scale/shift; n, k static."""

    def __init__(self, b, scale, shift, n, k):
        self.b, self.scale, self.shift, self.n, self.k = b, scale, shift, n, k

    def tree_flatten(self):
        return (self.b, self.scale, self.shift), (self.n, self.k)

    @classmethod
    def tree_unflatten(cls, aux, children):
        return cls(*children, *aux)


def pack_weight(w2d, scale, shift):
    """(K, N) f32 weight -> lane-dense, K-padded bf16 matrix + padded epilogue."""
    K, N = w2d.shape
    Np = _round_up(max(N, 128), 128)
    Kp = _round_up(K, 128)
    b = jnp.zeros((Kp, Np), jnp.bfloat16).at[:K, :N].set(
        w2d.astype(jnp.bfloat16))
    sc = jnp.zeros((1, Np), jnp.float32).at[0, :N].set(
        scale.astype(jnp.float32))
    sh = jnp.zeros((1, Np), jnp.float32).at[0, :N].set(
        shift.astype(jnp.float32))
    return PackedWeight(b, sc, sh, N, K)


def _pick_tk(Kp):
    if Kp <= MAX_TK:
        return Kp
    units = Kp // 128
    best = 1
    for d in range(1, units + 1):
        if units % d == 0 and d * 128 <= MAX_TK:
            best = d
    return best * 128


def fused_matmul_packed(a, pw, *, act="none", out_dtype=jnp.bfloat16,
                        neg=NEG_SLOPE):
    """act((a @ W) * scale + shift) with a fused-epilogue Pallas matmul."""
    M, K_in = a.shape
    Kp, Np = pw.b.shape
    N = pw.n
    assert K_in <= Kp

    a = a.astype(jnp.bfloat16)
    if K_in != Kp:
        a = jnp.pad(a, ((0, 0), (0, Kp - K_in)))

    tm = min(1024, _round_up(M, 8))
    Mp = _round_up(M, tm)
    if Mp != M:
        a = jnp.pad(a, ((0, Mp - M), (0, 0)))

    # Lane-dense 256 tiles, but fall back to 128 when the M grid has a single
    # block so a v7x megacore still gets >= 2 parallel output blocks.
    if Mp == tm and Np >= 256:
        tn = 128
    else:
        tn = 256 if Np % 256 == 0 else 128
    tk = _pick_tk(Kp)
    grid = (Mp // tm, Np // tn, Kp // tk)

    in_specs = [
        pl.BlockSpec((tm, tk), lambda i, j, k: (i, k)),
        pl.BlockSpec((tk, tn), lambda i, j, k: (k, j)),
        pl.BlockSpec((1, tn), lambda i, j, k: (0, j)),
        pl.BlockSpec((1, tn), lambda i, j, k: (0, j)),
    ]
    out_spec = pl.BlockSpec((tm, tn), lambda i, j, k: (i, j))

    out_dt = jnp.dtype(out_dtype)
    common = dict(
        out_shape=jax.ShapeDtypeStruct((Mp, Np), out_dt),
        compiler_params=pltpu.CompilerParams(
            dimension_semantics=("parallel", "parallel", "arbitrary"),
            vmem_limit_bytes=VMEM_LIMIT),
        cost_estimate=pl.CostEstimate(
            flops=2 * Mp * Np * Kp,
            transcendentals=(Mp * Np if act == "tanh" else 0),
            bytes_accessed=2 * (Mp * Kp + Kp * Np) + Mp * Np * out_dt.itemsize),
    )

    if out_dt == jnp.dtype(jnp.float32):
        kernel = functools.partial(_mm_kernel_inplace, act=act, neg=neg)
        out = pl.pallas_call(
            kernel,
            grid_spec=pltpu.PrefetchScalarGridSpec(
                num_scalar_prefetch=0, grid=grid,
                in_specs=in_specs, out_specs=out_spec),
            **common,
        )(a, pw.b, pw.scale, pw.shift)
    else:
        kernel = functools.partial(_mm_kernel_accum, act=act, neg=neg)
        out = pl.pallas_call(
            kernel,
            grid_spec=pltpu.PrefetchScalarGridSpec(
                num_scalar_prefetch=0, grid=grid,
                in_specs=in_specs, out_specs=out_spec,
                scratch_shapes=[pltpu.VMEM((tm, tn), jnp.float32)]),
            **common,
        )(a, pw.b, pw.scale, pw.shift)

    if (Mp, Np) != (M, N):
        out = out[:M, :N]
    return out


# ----------------------------------------------------------------------------
# Conv / conv-transpose wrappers (NHWC internally)
# ----------------------------------------------------------------------------
def _im2col_nhwc(x, k, stride, pad, k_total=None):
    """(B,H,W,C) -> (B*Ho*Wo, k*k*C [+zero pad to k_total]), (kh,kw,C) order."""
    B, H, W, C = x.shape
    xp = jnp.pad(x, ((0, 0), (pad, pad), (pad, pad), (0, 0))) if pad else x
    Ho = (H + 2 * pad - k) // stride + 1
    Wo = (W + 2 * pad - k) // stride + 1
    cols = [xp[:, i:i + stride * Ho:stride, j:j + stride * Wo:stride, :]
            for i in range(k) for j in range(k)]
    if k_total is not None and k_total > k * k * C:
        cols.append(jnp.zeros((B, Ho, Wo, k_total - k * k * C), x.dtype))
    col = jnp.concatenate(cols, axis=-1)
    return col.reshape(B * Ho * Wo, col.shape[-1]), Ho, Wo


def _dilate_nhwc(x, stride):
    if stride == 1:
        return x
    B, H, W, C = x.shape
    out = jnp.zeros((B, (H - 1) * stride + 1, (W - 1) * stride + 1, C), x.dtype)
    return out.at[:, ::stride, ::stride, :].set(x)


def _conv_w_to_mat(w):
    """(Cout,Cin,k,k) OIHW -> (k*k*Cin, Cout), matching the im2col column order."""
    O, Cin, k, _ = w.shape
    return jnp.transpose(w, (2, 3, 1, 0)).reshape(k * k * Cin, O)


def _convT_as_conv_w(w):
    """PyTorch ConvTranspose2d (Cin,Cout,k,k) -> equivalent Conv2d OIHW weight."""
    return jnp.transpose(jnp.flip(w, axis=(2, 3)), (1, 0, 2, 3))


def conv2d_packed(x, pw, *, k, stride, padding, act, out_dtype=jnp.bfloat16):
    cols, Ho, Wo = _im2col_nhwc(x, k, stride, padding, k_total=pw.b.shape[0])
    y = fused_matmul_packed(cols, pw, act=act, out_dtype=out_dtype)
    return y.reshape(x.shape[0], Ho, Wo, pw.n)


def conv_transpose2d_packed(x, pw, *, k, stride, padding, output_padding, act,
                            out_dtype=jnp.bfloat16):
    xd = _dilate_nhwc(x, stride)
    lo = k - 1 - padding
    hi = k - 1 - padding + output_padding
    xp = jnp.pad(xd, ((0, 0), (lo, hi), (lo, hi), (0, 0)))
    return conv2d_packed(xp, pw, k=k, stride=1, padding=0, act=act,
                         out_dtype=out_dtype)


def _bn_fold(p):
    scale = p["gamma"] / jnp.sqrt(p["var"] + BN_EPS)
    shift = p["beta"] + scale * (p["b"] - p["mean"])
    return scale, shift


# ----------------------------------------------------------------------------
# Parameters (PyTorch layouts) + one-time packing
# ----------------------------------------------------------------------------
def _init_conv_bn(key, cin, cout, k, transposed=False):
    k1, k2, k3, k4, k5, k6 = jax.random.split(key, 6)
    fan_in = cin * k * k
    w_shape = (cin, cout, k, k) if transposed else (cout, cin, k, k)
    return dict(
        w=jax.random.normal(k1, w_shape, jnp.float32) / (fan_in ** 0.5),
        b=0.05 * jax.random.normal(k2, (cout,), jnp.float32),
        gamma=1.0 + 0.1 * jax.random.normal(k3, (cout,), jnp.float32),
        beta=0.1 * jax.random.normal(k4, (cout,), jnp.float32),
        mean=0.05 * jax.random.normal(k5, (cout,), jnp.float32),
        var=1.0 + 0.1 * jax.random.uniform(k6, (cout,), jnp.float32),
    )


def _init_linear(key, fin, fout):
    k1, k2 = jax.random.split(key)
    return dict(w=jax.random.normal(k1, (fout, fin), jnp.float32) / (fin ** 0.5),
                b=0.05 * jax.random.normal(k2, (fout,), jnp.float32))


def init_vae_params(key):
    keys = iter(jax.random.split(key, 20))
    params = {}
    enc, cin = [], IN_CHANNELS
    for h in HIDDEN_DIMS:
        enc.append(_init_conv_bn(next(keys), cin, h, 3))
        cin = h
    params["encoder"] = enc
    flat = HIDDEN_DIMS[-1] * 4
    params["fc_mu"] = _init_linear(next(keys), flat, LATENT_DIM)
    params["fc_var"] = _init_linear(next(keys), flat, LATENT_DIM)
    params["decoder_input"] = _init_linear(next(keys), LATENT_DIM, flat)
    rev = HIDDEN_DIMS[::-1]
    params["decoder"] = [_init_conv_bn(next(keys), rev[i], rev[i + 1], 3,
                                       transposed=True)
                         for i in range(len(rev) - 1)]
    params["final_ct"] = _init_conv_bn(next(keys), rev[-1], rev[-1], 3,
                                       transposed=True)
    kf1, kf2 = jax.random.split(next(keys))
    params["final_conv"] = dict(
        w=jax.random.normal(kf1, (3, rev[-1], 3, 3), jnp.float32)
        / ((rev[-1] * 9) ** 0.5),
        b=0.05 * jax.random.normal(kf2, (3,), jnp.float32))
    return params


def prepare_params(params):
    """One-time weight repacking: transpose/flip, fold BN, pad, cast to bf16."""
    pk = {}
    pk["encoder"] = []
    for p in params["encoder"]:
        scale, shift = _bn_fold(p)
        pk["encoder"].append(pack_weight(_conv_w_to_mat(p["w"]), scale, shift))

    # fc_mu and fc_var fused into one matmul (concatenated along N).
    w_cat = jnp.concatenate([params["fc_mu"]["w"], params["fc_var"]["w"]],
                            axis=0).T
    b_cat = jnp.concatenate([params["fc_mu"]["b"], params["fc_var"]["b"]],
                            axis=0)
    pk["fc_muvar"] = pack_weight(w_cat, jnp.ones_like(b_cat), b_cat)

    w = params["decoder_input"]["w"]
    b = params["decoder_input"]["b"]
    pk["decoder_input"] = pack_weight(w.T, jnp.ones_like(b), b)

    pk["decoder"] = []
    for p in params["decoder"]:
        scale, shift = _bn_fold(p)
        pk["decoder"].append(
            pack_weight(_conv_w_to_mat(_convT_as_conv_w(p["w"])), scale, shift))

    p = params["final_ct"]
    scale, shift = _bn_fold(p)
    pk["final_ct"] = pack_weight(_conv_w_to_mat(_convT_as_conv_w(p["w"])),
                                 scale, shift)

    pc = params["final_conv"]
    pk["final_conv"] = pack_weight(_conv_w_to_mat(pc["w"]),
                                   jnp.ones_like(pc["b"]), pc["b"])
    return pk


# ----------------------------------------------------------------------------
# Forward passes
# ----------------------------------------------------------------------------
def vae_forward_pallas(packed, x_nchw, eps):
    B = x_nchw.shape[0]
    h = jnp.transpose(x_nchw, (0, 2, 3, 1)).astype(jnp.bfloat16)  # NHWC bf16

    # ---- encode ----
    for pw in packed["encoder"]:
        h = conv2d_packed(h, pw, k=3, stride=2, padding=1, act="leaky_relu")
    flat = jnp.transpose(h, (0, 3, 1, 2)).reshape(B, -1)   # torch.flatten(.,1)
    muvar = fused_matmul_packed(flat, packed["fc_muvar"], act="none",
                                out_dtype=jnp.float32)
    mu = muvar[:, :LATENT_DIM]
    log_var = muvar[:, LATENT_DIM:2 * LATENT_DIM]

    # ---- reparameterize (tiny; plain jnp) ----
    z = mu + eps * jnp.exp(0.5 * log_var)

    # ---- decode ----
    d = fused_matmul_packed(z, packed["decoder_input"], act="none",
                            out_dtype=jnp.bfloat16)
    h = d.reshape(B, HIDDEN_DIMS[-1], 2, 2).transpose(0, 2, 3, 1)   # -> NHWC
    for pw in packed["decoder"]:
        h = conv_transpose2d_packed(h, pw, k=3, stride=2, padding=1,
                                    output_padding=1, act="leaky_relu")
    h = conv_transpose2d_packed(h, packed["final_ct"], k=3, stride=2, padding=1,
                                output_padding=1, act="leaky_relu")
    h = conv2d_packed(h, packed["final_conv"], k=3, stride=1, padding=1,
                      act="tanh", out_dtype=jnp.float32)

    recon = jnp.transpose(h, (0, 3, 1, 2))                  # back to NCHW
    return recon, x_nchw, mu, log_var


# Pure-f32 JAX reference (no Pallas, raw PyTorch-layout params).
def _conv2d_ref(x, w_oihw, scale, shift, *, stride, padding, act):
    cols, Ho, Wo = _im2col_nhwc(x, w_oihw.shape[2], stride, padding)
    y = jnp.dot(cols, _conv_w_to_mat(w_oihw)) * scale + shift
    return _apply_act(y, act).reshape(x.shape[0], Ho, Wo, w_oihw.shape[0])


def _conv_transpose2d_ref(x, w_iohw, scale, shift, *, stride, padding,
                          output_padding, act):
    k = w_iohw.shape[2]
    xd = _dilate_nhwc(x, stride)
    lo = k - 1 - padding
    hi = k - 1 - padding + output_padding
    xp = jnp.pad(xd, ((0, 0), (lo, hi), (lo, hi), (0, 0)))
    return _conv2d_ref(xp, _convT_as_conv_w(w_iohw), scale, shift,
                       stride=1, padding=0, act=act)


def vae_forward_ref(params, x_nchw, eps):
    B = x_nchw.shape[0]
    h = jnp.transpose(x_nchw, (0, 2, 3, 1))
    for p in params["encoder"]:
        scale, shift = _bn_fold(p)
        h = _conv2d_ref(h, p["w"], scale, shift, stride=2, padding=1,
                        act="leaky_relu")
    flat = jnp.transpose(h, (0, 3, 1, 2)).reshape(B, -1)
    mu = jnp.dot(flat, params["fc_mu"]["w"].T) + params["fc_mu"]["b"]
    log_var = jnp.dot(flat, params["fc_var"]["w"].T) + params["fc_var"]["b"]
    z = mu + eps * jnp.exp(0.5 * log_var)
    d = jnp.dot(z, params["decoder_input"]["w"].T) + params["decoder_input"]["b"]
    h = d.reshape(B, HIDDEN_DIMS[-1], 2, 2).transpose(0, 2, 3, 1)
    for p in params["decoder"]:
        scale, shift = _bn_fold(p)
        h = _conv_transpose2d_ref(h, p["w"], scale, shift, stride=2, padding=1,
                                  output_padding=1, act="leaky_relu")
    p = params["final_ct"]
    scale, shift = _bn_fold(p)
    h = _conv_transpose2d_ref(h, p["w"], scale, shift, stride=2, padding=1,
                              output_padding=1, act="leaky_relu")
    pc = params["final_conv"]
    h = _conv2d_ref(h, pc["w"], jnp.ones((3,), jnp.float32), pc["b"],
                    stride=1, padding=1, act="tanh")
    return jnp.transpose(h, (0, 3, 1, 2)), x_nchw, mu, log_var


# ----------------------------------------------------------------------------
# Main
# ----------------------------------------------------------------------------
if __name__ == "__main__":
    key = jax.random.PRNGKey(0)
    k_param, k_x, k_eps, ka, kb, ks, kh = jax.random.split(key, 7)

    # --- unit check: fused bf16 matmul + epilogue vs f32 (exercises padding) ---
    a = jax.random.normal(ka, (300, 260), jnp.float32)
    w = jax.random.normal(kb, (260, 70), jnp.float32)
    sc = jax.random.normal(ks, (70,), jnp.float32)
    sh = jax.random.normal(kh, (70,), jnp.float32)
    pw = pack_weight(w, sc, sh)
    got = jax.block_until_ready(
        fused_matmul_packed(a, pw, act="leaky_relu", out_dtype=jnp.float32))
    want = _apply_act(jnp.dot(a, w) * sc + sh, "leaky_relu")
    assert got.shape == want.shape
    rel = float(jnp.max(jnp.abs(got - want)) / (jnp.max(jnp.abs(want)) + 1e-6))
    assert rel < 3e-2, f"fused_matmul mismatch: {rel}"

    # --- full VanillaVAE forward ---
    # 64x64 input is what the module geometry implies: 5 stride-2 convs -> 2x2
    # spatial, matching fc in_features = hidden_dims[-1]*4 and view(-1,512,2,2).
    params = init_vae_params(k_param)
    packed = prepare_params(params)          # one-time weight repacking
    x = jax.random.normal(k_x, (2, IN_CHANNELS, 64, 64), jnp.float32)
    eps = jax.random.normal(k_eps, (2, LATENT_DIM), jnp.float32)

    fwd = jax.jit(vae_forward_pallas)
    recon, x_in, mu, log_var = fwd(packed, x, eps)
    jax.block_until_ready(recon)

    assert recon.shape == (2, 3, 64, 64) and recon.dtype == jnp.float32
    assert mu.shape == (2, LATENT_DIM) and log_var.shape == (2, LATENT_DIM)
    assert bool(jnp.all(jnp.isfinite(recon)))

    # --- cross-check against the pure-f32 JAX reference ---
    recon_r, _, mu_r, lv_r = jax.jit(vae_forward_ref)(params, x, eps)
    jax.block_until_ready(recon_r)

    def relerr(u, v):
        return float(jnp.max(jnp.abs(u - v)) / (jnp.max(jnp.abs(v)) + 1e-6))

    assert relerr(mu, mu_r) < 1e-1, f"mu mismatch: {relerr(mu, mu_r)}"
    assert relerr(log_var, lv_r) < 1e-1, f"log_var mismatch: {relerr(log_var, lv_r)}"
    assert relerr(recon, recon_r) < 1e-1, f"recon mismatch: {relerr(recon, recon_r)}"

    print("KERNEL_OK")
</pallas_src>

<mosaic_0001>
module attributes {stable_mosaic.version = 11 : i64} {
  func.func @_mm_kernel_inplace(%arg0: i32, %arg1: i32, %arg2: i32, %arg3: memref<304x384xbf16, #tpu.memory_space<vmem>>, %arg4: memref<384x128xbf16, #tpu.memory_space<vmem>>, %arg5: memref<1x128xf32, #tpu.memory_space<vmem>>, %arg6: memref<1x128xf32, #tpu.memory_space<vmem>>, %arg7: memref<304x128xf32, #tpu.memory_space<vmem>>) attributes {dimension_semantics = [#tpu.dimension_semantics<parallel>, #tpu.dimension_semantics<parallel>, #tpu.dimension_semantics<arbitrary>], iteration_bounds = array<i64: 1, 1, 1>, scalar_prefetch = 0 : i64, scratch_operands = 0 : i64, tpu.core_type = #tpu.core_type<tc>, window_params = [{transform_indices = @transform_0, window_bounds = array<i64: 304, 384>}, {transform_indices = @transform_1, window_bounds = array<i64: 384, 128>}, {transform_indices = @transform_2, window_bounds = array<i64: 1, 128>}, {transform_indices = @transform_3, window_bounds = array<i64: 1, 128>}, {transform_indices = @transform_4, window_bounds = array<i64: 304, 128>}]} {
    %c0_i32 = arith.constant 0 : i32
    %0 = arith.cmpi eq, %arg2, %c0_i32 : i32
    %1 = arith.extui %0 : i1 to i32
    %c0_i32_0 = arith.constant 0 : i32
    %2 = arith.cmpi ne, %1, %c0_i32_0 : i32
    scf.if %2 {
      %cst_10 = arith.constant 0.000000e+00 : f32
      %12 = vector.broadcast %cst_10 : f32 to vector<304x128xf32>
      %c0_11 = arith.constant 0 : index
      %c0_12 = arith.constant 0 : index
      %13 = vector.load %arg7[%c0_11, %c0_12] : memref<304x128xf32, #tpu.memory_space<vmem>>, vector<304x128xf32>
      tpu.vector_store %arg7[%c0_11, %c0_12], %12 {strides = array<i32>} : memref<304x128xf32, #tpu.memory_space<vmem>>, vector<304x128xf32>,
    } else {
    }
    %c0 = arith.constant 0 : index
    %c0_1 = arith.constant 0 : index
    %3 = vector.load %arg7[%c0, %c0_1] : memref<304x128xf32, #tpu.memory_space<vmem>>, vector<304x128xf32>
    %c0_2 = arith.constant 0 : index
    %c0_3 = arith.constant 0 : index
    %4 = vector.load %arg3[%c0_2, %c0_3] : memref<304x384xbf16, #tpu.memory_space<vmem>>, vector<304x384xbf16>
    %c0_4 = arith.constant 0 : index
    %c0_5 = arith.constant 0 : index
    %5 = vector.load %arg4[%c0_4, %c0_5] : memref<384x128xbf16, #tpu.memory_space<vmem>>, vector<384x128xbf16>
    %cst = arith.constant dense<0.000000e+00> : vector<304x128xf32>
    %6 = tpu.matmul %4, %5, %cst {dimension_numbers = #tpu.dot_dimension_numbers<[1], [0], [0], [1], [0, 0, 1, 1], [], []>} : vector<304x384xbf16>, vector<384x128xbf16>, vector<304x128xf32> -> vector<304x128xf32>
    %7 = arith.addf %3, %6 : vector<304x128xf32>
    %c0_6 = arith.constant 0 : index
    %c0_7 = arith.constant 0 : index
    %8 = vector.load %arg7[%c0_6, %c0_7] : memref<304x128xf32, #tpu.memory_space<vmem>>, vector<304x128xf32>
    tpu.vector_store %arg7[%c0_6, %c0_7], %7 {strides = array<i32>} : memref<304x128xf32, #tpu.memory_space<vmem>>, vector<304x128xf32>,
    %c0_i32_8 = arith.constant 0 : i32
    %9 = arith.cmpi eq, %arg2, %c0_i32_8 : i32
    %10 = arith.extui %9 : i1 to i32
    %c0_i32_9 = arith.constant 0 : i32
    %11 = arith.cmpi ne, %10, %c0_i32_9 : i32
    scf.if %11 {
      %c0_10 = arith.constant 0 : index
      %c0_11 = arith.constant 0 : index
      %12 = vector.load %arg7[%c0_10, %c0_11] : memref<304x128xf32, #tpu.memory_space<vmem>>, vector<304x128xf32>
      %c0_12 = arith.constant 0 : index
      %c0_13 = arith.constant 0 : index
      %13 = vector.load %arg5[%c0_12, %c0_13] : memref<1x128xf32, #tpu.memory_space<vmem>>, vector<1x128xf32>
      %c0_14 = arith.constant 0 : index
      %c0_15 = arith.constant 0 : index
      %14 = vector.load %arg6[%c0_14, %c0_15] : memref<1x128xf32, #tpu.memory_space<vmem>>, vector<1x128xf32>
      %15 = vector.broadcast %13 : vector<1x128xf32> to vector<304x128xf32>
      %16 = arith.mulf %12, %15 : vector<304x128xf32>
      %17 = vector.broadcast %14 : vector<1x128xf32> to vector<304x128xf32>
      %18 = arith.addf %16, %17 : vector<304x128xf32>
      %cst_16 = arith.constant 0.000000e+00 : f32
      %19 = vector.broadcast %cst_16 : f32 to vector<304x128xf32>
      %20 = arith.cmpf oge, %18, %19 : vector<304x128xf32>
      %cst_17 = arith.constant 0.00999999977 : f32
      %21 = vector.broadcast %cst_17 : f32 to vector<304x128xf32>
      %22 = arith.mulf %21, %18 : vector<304x128xf32>
      %23 = arith.select %20, %18, %22 : vector<304x128xi1>, vector<304x128xf32>
      %c0_18 = arith.constant 0 : index
      %c0_19 = arith.constant 0 : index
      %24 = vector.load %arg7[%c0_18, %c0_19] : memref<304x128xf32, #tpu.memory_space<vmem>>, vector<304x128xf32>
      tpu.vector_store %arg7[%c0_18, %c0_19], %23 {strides = array<i32>} : memref<304x128xf32, #tpu.memory_space<vmem>>, vector<304x128xf32>,
    } else {
    }
    return
  }
  func.func @transform_0(%arg0: i32, %arg1: i32, %arg2: i32) -> (i32, i32) {
    %c0_i32 = arith.constant 0 : i32
    return %arg0, %arg2 : i32, i32
  }
  func.func @transform_1(%arg0: i32, %arg1: i32, %arg2: i32) -> (i32, i32) {
    %c0_i32 = arith.constant 0 : i32
    return %arg2, %arg1 : i32, i32
  }
  func.func @transform_2(%arg0: i32, %arg1: i32, %arg2: i32) -> (i32, i32) {
    %c0_i32 = arith.constant 0 : i32
    %c0_i32_0 = arith.constant 0 : i32
    return %c0_i32, %arg1 : i32, i32
  }
  func.func @transform_3(%arg0: i32, %arg1: i32, %arg2: i32) -> (i32, i32) {
    %c0_i32 = arith.constant 0 : i32
    %c0_i32_0 = arith.constant 0 : i32
    return %c0_i32, %arg1 : i32, i32
  }
  func.func @transform_4(%arg0: i32, %arg1: i32, %arg2: i32) -> (i32, i32) {
    %c0_i32 = arith.constant 0 : i32
    return %arg0, %arg1 : i32, i32
  }
}

</mosaic_0001>

<llo_original>
// kernel: tpu_custom_call.1
$region0: #{tpu_custom_call.1}
  #allocation0 [shape = 'u32[]', space=smem, size = 0x4, offset = 0x4, fixed_abs, tag = 'smem constant byte address 0x4 - core index']
  #allocation1 [shape = 'u32[72,128]{1,0:T(1,128)}', space=vmem, size = 0x9000, scoped, tag = 'internal scratch']
  %s0 = inlined_call_operand.hbm [shape: bf16[304,384], index: 0, kind: input, shape index: {}]
  %s1 = inlined_call_operand.hbm [shape: bf16[384,128], index: 1, kind: input, shape index: {}]
  %s2 = inlined_call_operand.vmem [shape: f32[1,128], index: 2, kind: input, shape index: {}]
  %s3 = inlined_call_operand.vmem [shape: f32[1,128], index: 3, kind: input, shape index: {}]
  %s4 = inlined_call_operand.hbm [shape: f32[304,128], index: 4, kind: output, shape index: {}]
  %s5 = sld [smem:[#allocation0]]
  $region42: #{tpu_custom_call.1} parent=0
    _
  %s7 = ssub.s32 1, %s5
  %s8 = scalar_select 0, %s7, %s5
  $region1: #{tpu_custom_call.1} parent=0
    #allocation2 [shape = 'u8[233472]{0}', space=vmem, size = 0x39000, scoped, tag = 'input window, operand 0, single buffered']
    #allocation3 [shape = 's32[1]{0}', space=sflag, size = 0x4, scoped, tag = 'scoped memory for tpu_custom_call.1']
    #allocation4 [shape = 's32[1]{0}', space=sflag, size = 0x4, scoped, tag = 'scoped memory for tpu_custom_call.1']
    #allocation5 [shape = 'u8[98304]{0}', space=vmem, size = 0x18000, scoped, tag = 'input window, operand 1, single buffered']
    #allocation6 [shape = 's32[1]{0}', space=sflag, size = 0x4, scoped, tag = 'scoped memory for tpu_custom_call.1']
    #allocation7 [shape = 'u8[155648]{0}', space=vmem, size = 0x26000, scoped, tag = 'output window, operand 0, single buffered']
    %9 = vsyncpa [#allocation3], 0
    %10 = vsyncpa [#allocation6], 0
    %11 = vsyncpa [#allocation4], 0
    // Predicated region
    $region2: #{tpu_custom_call.1} parent=1 // pred_check
      _
    $region3: #{tpu_custom_call.1} parent=1 // pred_check_branch
      %13 = sbr.rel (0) target = $region5
    $region4: #{tpu_custom_call.1} parent=1 // pred_region
      %15 = vsyncadd [#allocation3], 0
      %s16 = sshll.u32 %s0, 4
      %s17 = int_to_ptr.hbm [resolvable:$true] %s16
      %s18 = sshll.u32 [#allocation2], 4
      %s19 = int_to_ptr.vmem [resolvable:$true] %s18
      %24 = dma.hbm_to_vmem [thread:$0]  %s17, 7296, %s19, [#allocation3], 192, 192, 12
    $region5: #{tpu_custom_call.1} parent=1 // pred_fallthru
      _
    // Predicated region
    $region6: #{tpu_custom_call.1} parent=1 // pred_check
      _
    $region7: #{tpu_custom_call.1} parent=1 // pred_check_branch
      %26 = sbr.rel (0) target = $region9
    $region8: #{tpu_custom_call.1} parent=1 // pred_region
      %28 = vsyncadd [#allocation6], 0
      %s29 = sshll.u32 %s1, 4
      %s30 = int_to_ptr.hbm [resolvable:$true] %s29
      %s31 = sshll.u32 [#allocation5], 4
      %s32 = int_to_ptr.vmem [resolvable:$true] %s31
      %37 = dma.hbm_to_vmem [thread:$0]  %s30, 3072, %s32, [#allocation6], 64, 64, 4
    $region9: #{tpu_custom_call.1} parent=1 // pred_fallthru
      _
    // Predicated region
    $region10: #{tpu_custom_call.1} parent=1 // pred_check
      _
    $region11: #{tpu_custom_call.1} parent=1 // pred_check_branch
      %39 = sbr.rel (0) target = $region13
    $region12: #{tpu_custom_call.1} parent=1 // pred_region
      _
    $region13: #{tpu_custom_call.1} parent=1 // pred_fallthru
      _
    // Predicated region
    $region14: #{tpu_custom_call.1} parent=1 // pred_check
      _
    $region15: #{tpu_custom_call.1} parent=1 // pred_check_branch
      %41 = sbr.rel (0) target = $region17
    $region16: #{tpu_custom_call.1} parent=1 // pred_region
      _
    $region17: #{tpu_custom_call.1} parent=1 // pred_fallthru
      _
    // Predicated region
    $region18: #{tpu_custom_call.1} parent=1 // pred_check
      _
    $region19: #{tpu_custom_call.1} parent=1 // pred_check_branch
      %43 = sbr.rel (0) target = $region21
    $region20: #{tpu_custom_call.1} parent=1 // pred_region
      %45 = dma.done [#allocation3], 7296
    $region21: #{tpu_custom_call.1} parent=1 // pred_fallthru
      _
    // Predicated region
    $region22: #{tpu_custom_call.1} parent=1 // pred_check
      _
    $region23: #{tpu_custom_call.1} parent=1 // pred_check_branch
      %47 = sbr.rel (0) target = $region25
    $region24: #{tpu_custom_call.1} parent=1 // pred_region
      %49 = dma.done [#allocation6], 3072
    $region25: #{tpu_custom_call.1} parent=1 // pred_fallthru
      _
    %p50 = scmp.eq.s32.totalorder 0, 0
    // Predicated region
    $region26: #{tpu_custom_call.1} parent=1 // pred_check
      %p51 = pneg %p50
    $region27: #{tpu_custom_call.1} parent=1 // pred_check_branch
      %53 = sbr.rel (%p51) target = $region29
    $region28: #{tpu_custom_call.1} parent=1 // pred_region
      %54 = vst [vmem:[#allocation7] sm:$0xff] 0.0
      %55 = vst [vmem:[#allocation7 + $0x8] sm:$0xff] 0.0
      %56 = vst [vmem:[#allocation7 + $0x10] sm:$0xff] 0.0
      %57 = vst [vmem:[#allocation7 + $0x18] sm:$0xff] 0.0
      %58 = vst [vmem:[#allocation7 + $0x20] sm:$0xff] 0.0
      %59 = vst [vmem:[#allocation7 + $0x28] sm:$0xff] 0.0
      %60 = vst [vmem:[#allocation7 + $0x30] sm:$0xff] 0.0
      %61 = vst [vmem:[#allocation7 + $0x38] sm:$0xff] 0.0
      %62 = vst [vmem:[#allocation7 + $0x40] sm:$0xff] 0.0
      %63 = vst [vmem:[#allocation7 + $0x48] sm:$0xff] 0.0
      %64 = vst [vmem:[#allocation7 + $0x50] sm:$0xff] 0.0
      %65 = vst [vmem:[#allocation7 + $0x58] sm:$0xff] 0.0
      %66 = vst [vmem:[#allocation7 + $0x60] sm:$0xff] 0.0
      %67 = vst [vmem:[#allocation7 + $0x68] sm:$0xff] 0.0
      %68 = vst [vmem:[#allocation7 + $0x70] sm:$0xff] 0.0
      %69 = vst [vmem:[#allocation7 + $0x78] sm:$0xff] 0.0
      %70 = vst [vmem:[#allocation7 + $0x80] sm:$0xff] 0.0
      %71 = vst [vmem:[#allocation7 + $0x88] sm:$0xff] 0.0
      %72 = vst [vmem:[#allocation7 + $0x90] sm:$0xff] 0.0
      %73 = vst [vmem:[#allocation7 + $0x98] sm:$0xff] 0.0
      %74 = vst [vmem:[#allocation7 + $0xa0] sm:$0xff] 0.0
      %75 = vst [vmem:[#allocation7 + $0xa8] sm:$0xff] 0.0
      %76 = vst [vmem:[#allocation7 + $0xb0] sm:$0xff] 0.0
      %77 = vst [vmem:[#allocation7 + $0xb8] sm:$0xff] 0.0
      %78 = vst [vmem:[#allocation7 + $0xc0] sm:$0xff] 0.0
      %79 = vst [vmem:[#allocation7 + $0xc8] sm:$0xff] 0.0
      %80 = vst [vmem:[#allocation7 + $0xd0] sm:$0xff] 0.0
      %81 = vst [vmem:[#allocation7 + $0xd8] sm:$0xff] 0.0
      %82 = vst [vmem:[#allocation7 + $0xe0] sm:$0xff] 0.0
      %83 = vst [vmem:[#allocation7 + $0xe8] sm:$0xff] 0.0
      %84 = vst [vmem:[#allocation7 + $0xf0] sm:$0xff] 0.0
      %85 = vst [vmem:[#allocation7 + $0xf8] sm:$0xff] 0.0
      %86 = vst [vmem:[#allocation7 + $0x100] sm:$0xff] 0.0
      %87 = vst [vmem:[#allocation7 + $0x108] sm:$0xff] 0.0
      %88 = vst [vmem:[#allocation7 + $0x110] sm:$0xff] 0.0
      %89 = vst [vmem:[#allocation7 + $0x118] sm:$0xff] 0.0
      %90 = vst [vmem:[#allocation7 + $0x120] sm:$0xff] 0.0
      %91 = vst [vmem:[#allocation7 + $0x128] sm:$0xff] 0.0
    $region29: #{tpu_custom_call.1} parent=1 // pred_fallthru
      _
    %v92 = vld [vmem:[#allocation7] sm:$0xff]
    %v93 = vld [vmem:[#allocation7 + $0x8] sm:$0xff]
    %v94 = vld [vmem:[#allocation7 + $0x10] sm:$0xff]
    %v95 = vld [vmem:[#allocation7 + $0x18] sm:$0xff]
    %v96 = vld [vmem:[#allocation7 + $0x20] sm:$0xff]
    %v97 = vld [vmem:[#allocation7 + $0x28] sm:$0xff]
    %v98 = vld [vmem:[#allocation7 + $0x30] sm:$0xff]
    %v99 = vld [vmem:[#allocation7 + $0x38] sm:$0xff]
    %v100 = vld [vmem:[#allocation7 + $0x40] sm:$0xff]
    %v101 = vld [vmem:[#allocation7 + $0x48] sm:$0xff]
    %v102 = vld [vmem:[#allocation7 + $0x50] sm:$0xff]
    %v103 = vld [vmem:[#allocation7 + $0x58] sm:$0xff]
    %v104 = vld [vmem:[#allocation7 + $0x60] sm:$0xff]
    %v105 = vld [vmem:[#allocation7 + $0x68] sm:$0xff]
    %v106 = vld [vmem:[#allocation7 + $0x70] sm:$0xff]
    %v107 = vld [vmem:[#allocation7 + $0x78] sm:$0xff]
    %v108 = vld [vmem:[#allocation7 + $0x80] sm:$0xff]
    %v109 = vld [vmem:[#allocation7 + $0x88] sm:$0xff]
    %v110 = vld [vmem:[#allocation7 + $0x90] sm:$0xff]
    %v111 = vld [vmem:[#allocation7 + $0x98] sm:$0xff]
    %v112 = vld [vmem:[#allocation7 + $0xa0] sm:$0xff]
    %v113 = vld [vmem:[#allocation7 + $0xa8] sm:$0xff]
    %v114 = vld [vmem:[#allocation7 + $0xb0] sm:$0xff]
    %v115 = vld [vmem:[#allocation7 + $0xb8] sm:$0xff]
    %v116 = vld [vmem:[#allocation7 + $0xc0] sm:$0xff]
    %v117 = vld [vmem:[#allocation7 + $0xc8] sm:$0xff]
    %v118 = vld [vmem:[#allocation7 + $0xd0] sm:$0xff]
    %v119 = vld [vmem:[#allocation7 + $0xd8] sm:$0xff]
    %v120 = vld [vmem:[#allocation7 + $0xe0] sm:$0xff]
    %v121 = vld [vmem:[#allocation7 + $0xe8] sm:$0xff]
    %v122 = vld [vmem:[#allocation7 + $0xf0] sm:$0xff]
    %v123 = vld [vmem:[#allocation7 + $0xf8] sm:$0xff]
    %v124 = vld [vmem:[#allocation7 + $0x100] sm:$0xff]
    %v125 = vld [vmem:[#allocation7 + $0x108] sm:$0xff]
    %v126 = vld [vmem:[#allocation7 + $0x110] sm:$0xff]
    %v127 = vld [vmem:[#allocation7 + $0x118] sm:$0xff]
    %v128 = vld [vmem:[#allocation7 + $0x120] sm:$0xff]
    %v129 = vld [vmem:[#allocation7 + $0x128] sm:$0xff]
    %v130 = vld [vmem:[#allocation2] sm:$0xff]
    %v131 = vld [vmem:[#allocation2 + $0x8] sm:$0xf]
    %v132 = vld [vmem:[#allocation2 + $0xc] sm:$0xff]
    %v133 = vld [vmem:[#allocation2 + $0x14] sm:$0xf]
    %v134 = vld [vmem:[#allocation2 + $0x18] sm:$0xff]
    %v135 = vld [vmem:[#allocation2 + $0x20] sm:$0xf]
    %v136 = vld [vmem:[#allocation2 + $0x24] sm:$0xff]
    %v137 = vld [vmem:[#allocation2 + $0x2c] sm:$0xf]
    %v138 = vld [vmem:[#allocation2 + $0x30] sm:$0xff]
    %v139 = vld [vmem:[#allocation2 + $0x38] sm:$0xf]
    %v140 = vld [vmem:[#allocation2 + $0x3c] sm:$0xff]
    %v141 = vld [vmem:[#allocation2 + $0x44] sm:$0xf]
    %v142 = vld [vmem:[#allocation2 + $0x48] sm:$0xff]
    %v143 = vld [vmem:[#allocation2 + $0x50] sm:$0xf]
    %v144 = vld [vmem:[#allocation2 + $0x54] sm:$0xff]
    %v145 = vld [vmem:[#allocation2 + $0x5c] sm:$0xf]
    %v146 = vld [vmem:[#allocation2 + $0x60] sm:$0xff]
    %v147 = vld [vmem:[#allocation2 + $0x68] sm:$0xf]
    %v148 = vld [vmem:[#allocation2 + $0x6c] sm:$0xff]
    %v149 = vld [vmem:[#allocation2 + $0x74] sm:$0xf]
    %v150 = vld [vmem:[#allocation2 + $0x78] sm:$0xff]
    %v151 = vld [vmem:[#allocation2 + $0x80] sm:$0xf]
    %v152 = vld [vmem:[#allocation2 + $0x84] sm:$0xff]
    %v153 = vld [vmem:[#allocation2 + $0x8c] sm:$0xf]
    %v154 = vld [vmem:[#allocation2 + $0x90] sm:$0xff]
    %v155 = vld [vmem:[#allocation2 + $0x98] sm:$0xf]
    %v156 = vld [vmem:[#allocation2 + $0x9c] sm:$0xff]
    %v157 = vld [vmem:[#allocation2 + $0xa4] sm:$0xf]
    %v158 = vld [vmem:[#allocation2 + $0xa8] sm:$0xff]
    %v159 = vld [vmem:[#allocation2 + $0xb0] sm:$0xf]
    %v160 = vld [vmem:[#allocation2 + $0xb4] sm:$0xff]
    %v161 = vld [vmem:[#allocation2 + $0xbc] sm:$0xf]
    %v162 = vld [vmem:[#allocation2 + $0xc0] sm:$0xff]
    %v163 = vld [vmem:[#allocation2 + $0xc8] sm:$0xf]
    %v164 = vld [vmem:[#allocation2 + $0xcc] sm:$0xff]
    %v165 = vld [vmem:[#allocation2 + $0xd4] sm:$0xf]
    %v166 = vld [vmem:[#allocation2 + $0xd8] sm:$0xff]
    %v167 = vld [vmem:[#allocation2 + $0xe0] sm:$0xf]
    %v168 = vld [vmem:[#allocation2 + $0xe4] sm:$0xff]
    %v169 = vld [vmem:[#allocation2 + $0xec] sm:$0xf]
    %v170 = vld [vmem:[#allocation2 + $0xf0] sm:$0xff]
    %v171 = vld [vmem:[#allocation2 + $0xf8] sm:$0xf]
    %v172 = vld [vmem:[#allocation2 + $0xfc] sm:$0xff]
    %v173 = vld [vmem:[#allocation2 + $0x104] sm:$0xf]
    %v174 = vld [vmem:[#allocation2 + $0x108] sm:$0xff]
    %v175 = vld [vmem:[#allocation2 + $0x110] sm:$0xf]
    %v176 = vld [vmem:[#allocation2 + $0x114] sm:$0xff]
    %v177 = vld [vmem:[#allocation2 + $0x11c] sm:$0xf]
    %v178 = vld [vmem:[#allocation2 + $0x120] sm:$0xff]
    %v179 = vld [vmem:[#allocation2 + $0x128] sm:$0xf]
    %v180 = vld [vmem:[#allocation2 + $0x12c] sm:$0xff]
    %v181 = vld [vmem:[#allocation2 + $0x134] sm:$0xf]
    %v182 = vld [vmem:[#allocation2 + $0x138] sm:$0xff]
    %v183 = vld [vmem:[#allocation2 + $0x140] sm:$0xf]
    %v184 = vld [vmem:[#allocation2 + $0x144] sm:$0xff]
    %v185 = vld [vmem:[#allocation2 + $0x14c] sm:$0xf]
    %v186 = vld [vmem:[#allocation2 + $0x150] sm:$0xff]
    %v187 = vld [vmem:[#allocation2 + $0x158] sm:$0xf]
    %v188 = vld [vmem:[#allocation2 + $0x15c] sm:$0xff]
    %v189 = vld [vmem:[#allocation2 + $0x164] sm:$0xf]
    %v190 = vld [vmem:[#allocation2 + $0x168] sm:$0xff]
    %v191 = vld [vmem:[#allocation2 + $0x170] sm:$0xf]
    %v192 = vld [vmem:[#allocation2 + $0x174] sm:$0xff]
    %v193 = vld [vmem:[#allocation2 + $0x17c] sm:$0xf]
    %v194 = vld [vmem:[#allocation2 + $0x180] sm:$0xff]
    %v195 = vld [vmem:[#allocation2 + $0x188] sm:$0xf]
    %v196 = vld [vmem:[#allocation2 + $0x18c] sm:$0xff]
    %v197 = vld [vmem:[#allocation2 + $0x194] sm:$0xf]
    %v198 = vld [vmem:[#allocation2 + $0x198] sm:$0xff]
    %v199 = vld [vmem:[#allocation2 + $0x1a0] sm:$0xf]
    %v200 = vld [vmem:[#allocation2 + $0x1a4] sm:$0xff]
    %v201 = vld [vmem:[#allocation2 + $0x1ac] sm:$0xf]
    %v202 = vld [vmem:[#allocation2 + $0x1b0] sm:$0xff]
    %v203 = vld [vmem:[#allocation2 + $0x1b8] sm:$0xf]
    %v204 = vld [vmem:[#allocation2 + $0x1bc] sm:$0xff]
    %v205 = vld [vmem:[#allocation2 + $0x1c4] sm:$0xf]
    %v206 = vld [vmem:[#allocation5] sm:$0xf]
    %v207 = vld [vmem:[#allocation5 + $0x4] sm:$0xf]
    %v208 = vld [vmem:[#allocation5 + $0x8] sm:$0xf]
    %v209 = vld [vmem:[#allocation5 + $0xc] sm:$0xf]
    %v210 = vld [vmem:[#allocation5 + $0x10] sm:$0xf]
    %v211 = vld [vmem:[#allocation5 + $0x14] sm:$0xf]
    %v212 = vld [vmem:[#allocation5 + $0x18] sm:$0xf]
    %v213 = vld [vmem:[#allocation5 + $0x1c] sm:$0xf]
    %v214 = vld [vmem:[#allocation5 + $0x20] sm:$0xf]
    %v215 = vld [vmem:[#allocation5 + $0x24] sm:$0xf]
    %v216 = vld [vmem:[#allocation5 + $0x28] sm:$0xf]
    %v217 = vld [vmem:[#allocation5 + $0x2c] sm:$0xf]
    %v218 = vld [vmem:[#allocation5 + $0x30] sm:$0xf]
    %v219 = vld [vmem:[#allocation5 + $0x34] sm:$0xf]
    %v220 = vld [vmem:[#allocation5 + $0x38] sm:$0xf]
    %v221 = vld [vmem:[#allocation5 + $0x3c] sm:$0xf]
    %v222 = vld [vmem:[#allocation5 + $0x40] sm:$0xf]
    %v223 = vld [vmem:[#allocation5 + $0x44] sm:$0xf]
    %v224 = vld [vmem:[#allocation5 + $0x48] sm:$0xf]
    %v225 = vld [vmem:[#allocation5 + $0x4c] sm:$0xf]
    %v226 = vld [vmem:[#allocation5 + $0x50] sm:$0xf]
    %v227 = vld [vmem:[#allocation5 + $0x54] sm:$0xf]
    %v228 = vld [vmem:[#allocation5 + $0x58] sm:$0xf]
    %v229 = vld [vmem:[#allocation5 + $0x5c] sm:$0xf]
    %v230 = vld [vmem:[#allocation5 + $0x60] sm:$0xf]
    %v231 = vld [vmem:[#allocation5 + $0x64] sm:$0xf]
    %v232 = vld [vmem:[#allocation5 + $0x68] sm:$0xf]
    %v233 = vld [vmem:[#allocation5 + $0x6c] sm:$0xf]
    %v234 = vld [vmem:[#allocation5 + $0x70] sm:$0xf]
    %v235 = vld [vmem:[#allocation5 + $0x74] sm:$0xf]
    %v236 = vld [vmem:[#allocation5 + $0x78] sm:$0xf]
    %v237 = vld [vmem:[#allocation5 + $0x7c] sm:$0xf]
    %v238 = vld [vmem:[#allocation5 + $0x80] sm:$0xf]
    %v239 = vld [vmem:[#allocation5 + $0x84] sm:$0xf]
    %v240 = vld [vmem:[#allocation5 + $0x88] sm:$0xf]
    %v241 = vld [vmem:[#allocation5 + $0x8c] sm:$0xf]
    %v242 = vld [vmem:[#allocation5 + $0x90] sm:$0xf]
    %v243 = vld [vmem:[#allocation5 + $0x94] sm:$0xf]
    %v244 = vld [vmem:[#allocation5 + $0x98] sm:$0xf]
    %v245 = vld [vmem:[#allocation5 + $0x9c] sm:$0xf]
    %v246 = vld [vmem:[#allocation5 + $0xa0] sm:$0xf]
    %v247 = vld [vmem:[#allocation5 + $0xa4] sm:$0xf]
    %v248 = vld [vmem:[#allocation5 + $0xa8] sm:$0xf]
    %v249 = vld [vmem:[#allocation5 + $0xac] sm:$0xf]
    %v250 = vld [vmem:[#allocation5 + $0xb0] sm:$0xf]
    %v251 = vld [vmem:[#allocation5 + $0xb4] sm:$0xf]
    %v252 = vld [vmem:[#allocation5 + $0xb8] sm:$0xf]
    %v253 = vld [vmem:[#allocation5 + $0xbc] sm:$0xf]
    %v330 = vunpack.c.l.b16 %v130
    %v331 = vunpack.c.h.b16 %v130
    %v332 = vunpack.c.l.b16 %v131
    %v333 = vunpack.c.l.b16 %v132
    %v334 = vunpack.c.h.b16 %v132
    %v335 = vunpack.c.l.b16 %v133
    %v336 = vunpack.c.l.b16 %v134
    %v337 = vunpack.c.h.b16 %v134
    %v338 = vunpack.c.l.b16 %v135
    %v339 = vunpack.c.l.b16 %v136
    %v340 = vunpack.c.h.b16 %v136
    %v341 = vunpack.c.l.b16 %v137
    %v342 = vunpack.c.l.b16 %v138
    %v343 = vunpack.c.h.b16 %v138
    %v344 = vunpack.c.l.b16 %v139
    %v345 = vunpack.c.l.b16 %v140
    %v346 = vunpack.c.h.b16 %v140
    %v347 = vunpack.c.l.b16 %v141
    %v348 = vunpack.c.l.b16 %v142
    %v349 = vunpack.c.h.b16 %v142
    %v350 = vunpack.c.l.b16 %v143
    %v351 = vunpack.c.l.b16 %v144
    %v352 = vunpack.c.h.b16 %v144
    %v353 = vunpack.c.l.b16 %v145
    %v354 = vunpack.c.l.b16 %v146
    %v355 = vunpack.c.h.b16 %v146
    %v356 = vunpack.c.l.b16 %v147
    %v357 = vunpack.c.l.b16 %v148
    %v358 = vunpack.c.h.b16 %v148
    %v359 = vunpack.c.l.b16 %v149
    %v360 = vunpack.c.l.b16 %v150
    %v361 = vunpack.c.h.b16 %v150
    %v362 = vunpack.c.l.b16 %v151
    %v363 = vunpack.c.l.b16 %v152
    %v364 = vunpack.c.h.b16 %v152
    %v365 = vunpack.c.l.b16 %v153
    %v366 = vunpack.c.l.b16 %v154
    %v367 = vunpack.c.h.b16 %v154
    %v368 = vunpack.c.l.b16 %v155
    %v369 = vunpack.c.l.b16 %v156
    %v370 = vunpack.c.h.b16 %v156
    %v371 = vunpack.c.l.b16 %v157
    %v372 = vunpack.c.l.b16 %v158
    %v373 = vunpack.c.h.b16 %v158
    %v374 = vunpack.c.l.b16 %v159
    %v375 = vunpack.c.l.b16 %v160
    %v376 = vunpack.c.h.b16 %v160
    %v377 = vunpack.c.l.b16 %v161
    %v378 = vunpack.c.l.b16 %v162
    %v379 = vunpack.c.h.b16 %v162
    %v380 = vunpack.c.l.b16 %v163
    %v381 = vunpack.c.l.b16 %v164
    %v382 = vunpack.c.h.b16 %v164
    %v383 = vunpack.c.l.b16 %v165
    %v384 = vunpack.c.l.b16 %v166
    %v385 = vunpack.c.h.b16 %v166
    %v386 = vunpack.c.l.b16 %v167
    %v387 = vunpack.c.l.b16 %v168
    %v388 = vunpack.c.h.b16 %v168
    %v389 = vunpack.c.l.b16 %v169
    %v390 = vunpack.c.l.b16 %v170
    %v391 = vunpack.c.h.b16 %v170
    %v392 = vunpack.c.l.b16 %v171
    %v393 = vunpack.c.l.b16 %v172
    %v394 = vunpack.c.h.b16 %v172
    %v395 = vunpack.c.l.b16 %v173
    %v396 = vunpack.c.l.b16 %v174
    %v397 = vunpack.c.h.b16 %v174
    %v398 = vunpack.c.l.b16 %v175
    %v399 = vunpack.c.l.b16 %v176
    %v400 = vunpack.c.h.b16 %v176
    %v401 = vunpack.c.l.b16 %v177
    %v402 = vunpack.c.l.b16 %v178
    %v403 = vunpack.c.h.b16 %v178
    %v404 = vunpack.c.l.b16 %v179
    %v405 = vunpack.c.l.b16 %v180
    %v406 = vunpack.c.h.b16 %v180
    %v407 = vunpack.c.l.b16 %v181
    %v408 = vunpack.c.l.b16 %v182
    %v409 = vunpack.c.h.b16 %v182
    %v410 = vunpack.c.l.b16 %v183
    %v411 = vunpack.c.l.b16 %v184
    %v412 = vunpack.c.h.b16 %v184
    %v413 = vunpack.c.l.b16 %v185
    %v414 = vunpack.c.l.b16 %v186
    %v415 = vunpack.c.h.b16 %v186
    %v416 = vunpack.c.l.b16 %v187
    %v417 = vunpack.c.l.b16 %v188
    %v418 = vunpack.c.h.b16 %v188
    %v419 = vunpack.c.l.b16 %v189
    %v420 = vunpack.c.l.b16 %v190
    %v421 = vunpack.c.h.b16 %v190
    %v422 = vunpack.c.l.b16 %v191
    %v423 = vunpack.c.l.b16 %v192
    %v424 = vunpack.c.h.b16 %v192
    %v425 = vunpack.c.l.b16 %v193
    %v426 = vunpack.c.l.b16 %v194
    %v427 = vunpack.c.h.b16 %v194
    %v428 = vunpack.c.l.b16 %v195
    %v429 = vunpack.c.l.b16 %v196
    %v430 = vunpack.c.h.b16 %v196
    %v431 = vunpack.c.l.b16 %v197
    %v432 = vunpack.c.l.b16 %v198
    %v433 = vunpack.c.h.b16 %v198
    %v434 = vunpack.c.l.b16 %v199
    %v435 = vunpack.c.l.b16 %v200
    %v436 = vunpack.c.h.b16 %v200
    %v437 = vunpack.c.l.b16 %v201
    %v438 = vunpack.c.l.b16 %v202
    %v439 = vunpack.c.h.b16 %v202
    %v440 = vunpack.c.l.b16 %v203
    %v441 = vunpack.c.l.b16 %v204
    %v442 = vunpack.c.h.b16 %v204
    %v443 = vunpack.c.l.b16 %v205
    %v444 = vpack.c.b16 %v333, %v330
    %v445 = vpack.c.b16 %v334, %v331
    %v446 = vpack.c.b16 %v335, %v332
    %v447 = vpack.c.b16 %v339, %v336
    %v448 = vpack.c.b16 %v340, %v337
    %v449 = vpack.c.b16 %v341, %v338
    %v450 = vpack.c.b16 %v345, %v342
    %v451 = vpack.c.b16 %v346, %v343
    %v452 = vpack.c.b16 %v347, %v344
    %v453 = vpack.c.b16 %v351, %v348
    %v454 = vpack.c.b16 %v352, %v349
    %v455 = vpack.c.b16 %v353, %v350
    %v456 = vpack.c.b16 %v357, %v354
    %v457 = vpack.c.b16 %v358, %v355
    %v458 = vpack.c.b16 %v359, %v356
    %v459 = vpack.c.b16 %v363, %v360
    %v460 = vpack.c.b16 %v364, %v361
    %v461 = vpack.c.b16 %v365, %v362
    %v462 = vpack.c.b16 %v369, %v366
    %v463 = vpack.c.b16 %v370, %v367
    %v464 = vpack.c.b16 %v371, %v368
    %v465 = vpack.c.b16 %v375, %v372
    %v466 = vpack.c.b16 %v376, %v373
    %v467 = vpack.c.b16 %v377, %v374
    %v468 = vpack.c.b16 %v381, %v378
    %v469 = vpack.c.b16 %v382, %v379
    %v470 = vpack.c.b16 %v383, %v380
    %v471 = vpack.c.b16 %v387, %v384
    %v472 = vpack.c.b16 %v388, %v385
    %v473 = vpack.c.b16 %v389, %v386
    %v474 = vpack.c.b16 %v393, %v390
    %v475 = vpack.c.b16 %v394, %v391
    %v476 = vpack.c.b16 %v395, %v392
    %v477 = vpack.c.b16 %v399, %v396
    %v478 = vpack.c.b16 %v400, %v397
    %v479 = vpack.c.b16 %v401, %v398
    %v480 = vpack.c.b16 %v405, %v402
    %v481 = vpack.c.b16 %v406, %v403
    %v482 = vpack.c.b16 %v407, %v404
    %v483 = vpack.c.b16 %v411, %v408
    %v484 = vpack.c.b16 %v412, %v409
    %v485 = vpack.c.b16 %v413, %v410
    %v486 = vpack.c.b16 %v417, %v414
    %v487 = vpack.c.b16 %v418, %v415
    %v488 = vpack.c.b16 %v419, %v416
    %v489 = vpack.c.b16 %v423, %v420
    %v490 = vpack.c.b16 %v424, %v421
    %v491 = vpack.c.b16 %v425, %v422
    %v492 = vpack.c.b16 %v429, %v426
    %v493 = vpack.c.b16 %v430, %v427
    %v494 = vpack.c.b16 %v431, %v428
    %v495 = vpack.c.b16 %v435, %v432
    %v496 = vpack.c.b16 %v436, %v433
    %v497 = vpack.c.b16 %v437, %v434
    %v498 = vpack.c.b16 %v441, %v438
    %v499 = vpack.c.b16 %v442, %v439
    %v500 = vpack.c.b16 %v443, %v440
    %v606 = vunpack.c.l.b16 %v206
    %v607 = vunpack.c.l.b16 %v207
    %v608 = vunpack.c.l.b16 %v208
    %v609 = vunpack.c.l.b16 %v209
    %v610 = vunpack.c.l.b16 %v210
    %v611 = vunpack.c.l.b16 %v211
    %v612 = vunpack.c.l.b16 %v212
    %v613 = vunpack.c.l.b16 %v213
    %v614 = vunpack.c.l.b16 %v214
    %v615 = vunpack.c.l.b16 %v215
    %v616 = vunpack.c.l.b16 %v216
    %v617 = vunpack.c.l.b16 %v217
    %v618 = vunpack.c.l.b16 %v218
    %v619 = vunpack.c.l.b16 %v219
    %v620 = vunpack.c.l.b16 %v220
    %v621 = vunpack.c.l.b16 %v221
    %v622 = vunpack.c.l.b16 %v222
    %v623 = vunpack.c.l.b16 %v223
    %v624 = vunpack.c.l.b16 %v224
    %v625 = vunpack.c.l.b16 %v225
    %v626 = vunpack.c.l.b16 %v226
    %v627 = vunpack.c.l.b16 %v227
    %v628 = vunpack.c.l.b16 %v228
    %v629 = vunpack.c.l.b16 %v229
    %v630 = vunpack.c.l.b16 %v230
    %v631 = vunpack.c.l.b16 %v231
    %v632 = vunpack.c.l.b16 %v232
    %v633 = vunpack.c.l.b16 %v233
    %v634 = vunpack.c.l.b16 %v234
    %v635 = vunpack.c.l.b16 %v235
    %v636 = vunpack.c.l.b16 %v236
    %v637 = vunpack.c.l.b16 %v237
    %v638 = vunpack.c.l.b16 %v238
    %v639 = vunpack.c.l.b16 %v239
    %v640 = vunpack.c.l.b16 %v240
    %v641 = vunpack.c.l.b16 %v241
    %v642 = vunpack.c.l.b16 %v242
    %v643 = vunpack.c.l.b16 %v243
    %v644 = vunpack.c.l.b16 %v244
    %v645 = vunpack.c.l.b16 %v245
    %v646 = vunpack.c.l.b16 %v246
    %v647 = vunpack.c.l.b16 %v247
    %v648 = vunpack.c.l.b16 %v248
    %v649 = vunpack.c.l.b16 %v249
    %v650 = vunpack.c.l.b16 %v250
    %v651 = vunpack.c.l.b16 %v251
    %v652 = vunpack.c.l.b16 %v252
    %v653 = vunpack.c.l.b16 %v253
    %v654 = vpack.c.b16 %v607, %v606
    %v655 = vpack.c.b16 %v609, %v608
    %v656 = vpack.c.b16 %v611, %v610
    %v657 = vpack.c.b16 %v613, %v612
    %v658 = vpack.c.b16 %v615, %v614
    %v659 = vpack.c.b16 %v617, %v616
    %v660 = vpack.c.b16 %v619, %v618
    %v661 = vpack.c.b16 %v621, %v620
    %v662 = vpack.c.b16 %v623, %v622
    %v663 = vpack.c.b16 %v625, %v624
    %v664 = vpack.c.b16 %v627, %v626
    %v665 = vpack.c.b16 %v629, %v628
    %v666 = vpack.c.b16 %v631, %v630
    %v667 = vpack.c.b16 %v633, %v632
    %v668 = vpack.c.b16 %v635, %v634
    %v669 = vpack.c.b16 %v637, %v636
    %v670 = vpack.c.b16 %v639, %v638
    %v671 = vpack.c.b16 %v641, %v640
    %v672 = vpack.c.b16 %v643, %v642
    %v673 = vpack.c.b16 %v645, %v644
    %v674 = vpack.c.b16 %v647, %v646
    %v675 = vpack.c.b16 %v649, %v648
    %v676 = vpack.c.b16 %v651, %v650
    %v677 = vpack.c.b16 %v653, %v652
    %702 = vmatpush.bf16.msra.mxu0 %v661
    %703 = vmatpush.bf16.msra.mxu0 %v660
    %704 = vmatpush.bf16.msra.mxu0 %v659
    %705 = vmatpush.bf16.msra.mxu0 %v658
    %706 = vmatpush.bf16.msra.mxu0 %v657
    %707 = vmatpush.bf16.msra.mxu0 %v656
    %708 = vmatpush.bf16.msra.mxu0 %v655
    %709 = vmatpush.bf16.msra.mxu0 %v654
    %710 = vmatmul.bf16.gmra.mxu0 %v444
    %v711 = vpop.f32.mrf.mxu0
    %v712 = vadd.f32 0.0, %v711
    %v713 = vpop.f32.mrf.mxu0
    %v714 = vadd.f32 0.0, %v713
    %715 = vmatmul.bf16.gmra.mxu0 %v447
    %v716 = vpop.f32.mrf.mxu0
    %v717 = vadd.f32 0.0, %v716
    %v718 = vpop.f32.mrf.mxu0
    %v719 = vadd.f32 0.0, %v718
    %720 = vmatmul.bf16.gmra.mxu0 %v450
    %v721 = vpop.f32.mrf.mxu0
    %v722 = vadd.f32 0.0, %v721
    %v723 = vpop.f32.mrf.mxu0
    %v724 = vadd.f32 0.0, %v723
    %725 = vmatmul.bf16.gmra.mxu0 %v453
    %v726 = vpop.f32.mrf.mxu0
    %v727 = vadd.f32 0.0, %v726
    %v728 = vpop.f32.mrf.mxu0
    %v729 = vadd.f32 0.0, %v728
    %730 = vmatmul.bf16.gmra.mxu0 %v456
    %v731 = vpop.f32.mrf.mxu0
    %v732 = vadd.f32 0.0, %v731
    %v733 = vpop.f32.mrf.mxu0
    %v734 = vadd.f32 0.0, %v733
    %735 = vmatmul.bf16.gmra.mxu0 %v459
    %v736 = vpop.f32.mrf.mxu0
    %v737 = vadd.f32 0.0, %v736
    %v738 = vpop.f32.mrf.mxu0
    %v739 = vadd.f32 0.0, %v738
    %740 = vmatmul.bf16.gmra.mxu0 %v462
    %v741 = vpop.f32.mrf.mxu0
    %v742 = vadd.f32 0.0, %v741
    %v743 = vpop.f32.mrf.mxu0
    %v744 = vadd.f32 0.0, %v743
    %745 = vmatmul.bf16.gmra.mxu0 %v465
    %v746 = vpop.f32.mrf.mxu0
    %v747 = vadd.f32 0.0, %v746
    %v748 = vpop.f32.mrf.mxu0
    %v749 = vadd.f32 0.0, %v748
    %750 = vmatmul.bf16.gmra.mxu0 %v468
    %v751 = vpop.f32.mrf.mxu0
    %v752 = vadd.f32 0.0, %v751
    %v753 = vpop.f32.mrf.mxu0
    %v754 = vadd.f32 0.0, %v753
    %755 = vmatmul.bf16.gmra.mxu0 %v471
    %v756 = vpop.f32.mrf.mxu0
    %v757 = vadd.f32 0.0, %v756
    %v758 = vpop.f32.mrf.mxu0
    %v759 = vadd.f32 0.0, %v758
    %760 = vmatmul.bf16.gmra.mxu0 %v474
    %v761 = vpop.f32.mrf.mxu0
    %v762 = vadd.f32 0.0, %v761
    %v763 = vpop.f32.mrf.mxu0
    %v764 = vadd.f32 0.0, %v763
    %765 = vmatmul.bf16.gmra.mxu0 %v477
    %v766 = vpop.f32.mrf.mxu0
    %v767 = vadd.f32 0.0, %v766
    %v768 = vpop.f32.mrf.mxu0
    %v769 = vadd.f32 0.0, %v768
    %770 = vmatmul.bf16.gmra.mxu0 %v480
    %v771 = vpop.f32.mrf.mxu0
    %v772 = vadd.f32 0.0, %v771
    %v773 = vpop.f32.mrf.mxu0
    %v774 = vadd.f32 0.0, %v773
    %775 = vmatmul.bf16.gmra.mxu0 %v483
    %v776 = vpop.f32.mrf.mxu0
    %v777 = vadd.f32 0.0, %v776
    %v778 = vpop.f32.mrf.mxu0
    %v779 = vadd.f32 0.0, %v778
    %780 = vmatmul.bf16.gmra.mxu0 %v486
    %v781 = vpop.f32.mrf.mxu0
    %v782 = vadd.f32 0.0, %v781
    %v783 = vpop.f32.mrf.mxu0
    %v784 = vadd.f32 0.0, %v783
    %785 = vmatmul.bf16.gmra.mxu0 %v489
    %v786 = vpop.f32.mrf.mxu0
    %v787 = vadd.f32 0.0, %v786
    %v788 = vpop.f32.mrf.mxu0
    %v789 = vadd.f32 0.0, %v788
    %790 = vmatmul.bf16.gmra.mxu0 %v492
    %v791 = vpop.f32.mrf.mxu0
    %v792 = vadd.f32 0.0, %v791
    %v793 = vpop.f32.mrf.mxu0
    %v794 = vadd.f32 0.0, %v793
    %795 = vmatmul.bf16.gmra.mxu0 %v495
    %v796 = vpop.f32.mrf.mxu0
    %v797 = vadd.f32 0.0, %v796
    %v798 = vpop.f32.mrf.mxu0
    %v799 = vadd.f32 0.0, %v798
    %800 = vmatmul.bf16.gmra.mxu0 %v498
    %v801 = vpop.f32.mrf.mxu0
    %v802 = vadd.f32 0.0, %v801
    %v803 = vpop.f32.mrf.mxu0
    %v804 = vadd.f32 0.0, %v803
    %805 = vdwg.mxu0
    %806 = vmatpush.bf16.msra.mxu0 %v669
    %807 = vmatpush.bf16.msra.mxu0 %v668
    %808 = vmatpush.bf16.msra.mxu0 %v667
    %809 = vmatpush.bf16.msra.mxu0 %v666
    %810 = vmatpush.bf16.msra.mxu0 %v665
    %811 = vmatpush.bf16.msra.mxu0 %v664
    %812 = vmatpush.bf16.msra.mxu0 %v663
    %813 = vmatpush.bf16.msra.mxu0 %v662
    %814 = vmatmul.bf16.gmra.mxu0 %v445
    %v815 = vpop.f32.mrf.mxu0
    %v816 = vadd.f32 %v712, %v815
    %v817 = vpop.f32.mrf.mxu0
    %v818 = vadd.f32 %v714, %v817
    %819 = vmatmul.bf16.gmra.mxu0 %v448
    %v820 = vpop.f32.mrf.mxu0
    %v821 = vadd.f32 %v717, %v820
    %v822 = vpop.f32.mrf.mxu0
    %v823 = vadd.f32 %v719, %v822
    %824 = vmatmul.bf16.gmra.mxu0 %v451
    %v825 = vpop.f32.mrf.mxu0
    %v826 = vadd.f32 %v722, %v825
    %v827 = vpop.f32.mrf.mxu0
    %v828 = vadd.f32 %v724, %v827
    %829 = vmatmul.bf16.gmra.mxu0 %v454
    %v830 = vpop.f32.mrf.mxu0
    %v831 = vadd.f32 %v727, %v830
    %v832 = vpop.f32.mrf.mxu0
    %v833 = vadd.f32 %v729, %v832
    %834 = vmatmul.bf16.gmra.mxu0 %v457
    %v835 = vpop.f32.mrf.mxu0
    %v836 = vadd.f32 %v732, %v835
    %v837 = vpop.f32.mrf.mxu0
    %v838 = vadd.f32 %v734, %v837
    %839 = vmatmul.bf16.gmra.mxu0 %v460
    %v840 = vpop.f32.mrf.mxu0
    %v841 = vadd.f32 %v737, %v840
    %v842 = vpop.f32.mrf.mxu0
    %v843 = vadd.f32 %v739, %v842
    %844 = vmatmul.bf16.gmra.mxu0 %v463
    %v845 = vpop.f32.mrf.mxu0
    %v846 = vadd.f32 %v742, %v845
    %v847 = vpop.f32.mrf.mxu0
    %v848 = vadd.f32 %v744, %v847
    %849 = vmatmul.bf16.gmra.mxu0 %v466
    %v850 = vpop.f32.mrf.mxu0
    %v851 = vadd.f32 %v747, %v850
    %v852 = vpop.f32.mrf.mxu0
    %v853 = vadd.f32 %v749, %v852
    %854 = vmatmul.bf16.gmra.mxu0 %v469
    %v855 = vpop.f32.mrf.mxu0
    %v856 = vadd.f32 %v752, %v855
    %v857 = vpop.f32.mrf.mxu0
    %v858 = vadd.f32 %v754, %v857
    %859 = vmatmul.bf16.gmra.mxu0 %v472
    %v860 = vpop.f32.mrf.mxu0
    %v861 = vadd.f32 %v757, %v860
    %v862 = vpop.f32.mrf.mxu0
    %v863 = vadd.f32 %v759, %v862
    %864 = vmatmul.bf16.gmra.mxu0 %v475
    %v865 = vpop.f32.mrf.mxu0
    %v866 = vadd.f32 %v762, %v865
    %v867 = vpop.f32.mrf.mxu0
    %v868 = vadd.f32 %v764, %v867
    %869 = vmatmul.bf16.gmra.mxu0 %v478
    %v870 = vpop.f32.mrf.mxu0
    %v871 = vadd.f32 %v767, %v870
    %v872 = vpop.f32.mrf.mxu0
    %v873 = vadd.f32 %v769, %v872
    %874 = vmatmul.bf16.gmra.mxu0 %v481
    %v875 = vpop.f32.mrf.mxu0
    %v876 = vadd.f32 %v772, %v875
    %v877 = vpop.f32.mrf.mxu0
    %v878 = vadd.f32 %v774, %v877
    %879 = vmatmul.bf16.gmra.mxu0 %v484
    %v880 = vpop.f32.mrf.mxu0
    %v881 = vadd.f32 %v777, %v880
    %v882 = vpop.f32.mrf.mxu0
    %v883 = vadd.f32 %v779, %v882
    %884 = vmatmul.bf16.gmra.mxu0 %v487
    %v885 = vpop.f32.mrf.mxu0
    %v886 = vadd.f32 %v782, %v885
    %v887 = vpop.f32.mrf.mxu0
    %v888 = vadd.f32 %v784, %v887
    %889 = vmatmul.bf16.gmra.mxu0 %v490
    %v890 = vpop.f32.mrf.mxu0
    %v891 = vadd.f32 %v787, %v890
    %v892 = vpop.f32.mrf.mxu0
    %v893 = vadd.f32 %v789, %v892
    %894 = vmatmul.bf16.gmra.mxu0 %v493
    %v895 = vpop.f32.mrf.mxu0
    %v896 = vadd.f32 %v792, %v895
    %v897 = vpop.f32.mrf.mxu0
    %v898 = vadd.f32 %v794, %v897
    %899 = vmatmul.bf16.gmra.mxu0 %v496
    %v900 = vpop.f32.mrf.mxu0
    %v901 = vadd.f32 %v797, %v900
    %v902 = vpop.f32.mrf.mxu0
    %v903 = vadd.f32 %v799, %v902
    %904 = vmatmul.bf16.gmra.mxu0 %v499
    %v905 = vpop.f32.mrf.mxu0
    %v906 = vadd.f32 %v802, %v905
    %v907 = vpop.f32.mrf.mxu0
    %v908 = vadd.f32 %v804, %v907
    %909 = vdwg.mxu0
    %910 = vmatpush.bf16.msra.mxu0 %v677
    %911 = vmatpush.bf16.msra.mxu0 %v676
    %912 = vmatpush.bf16.msra.mxu0 %v675
    %913 = vmatpush.bf16.msra.mxu0 %v674
    %914 = vmatpush.bf16.msra.mxu0 %v673
    %915 = vmatpush.bf16.msra.mxu0 %v672
    %916 = vmatpush.bf16.msra.mxu0 %v671
    %917 = vmatpush.bf16.msra.mxu0 %v670
    %918 = vmatmul.bf16.gmra.mxu0 %v446
    %v919 = vpop.f32.mrf.mxu0
    %v920 = vadd.f32 %v816, %v919
    %v921 = vpop.f32.mrf.mxu0
    %v922 = vadd.f32 %v818, %v921
    %923 = vmatmul.bf16.gmra.mxu0 %v449
    %v924 = vpop.f32.mrf.mxu0
    %v925 = vadd.f32 %v821, %v924
    %v926 = vpop.f32.mrf.mxu0
    %v927 = vadd.f32 %v823, %v926
    %928 = vmatmul.bf16.gmra.mxu0 %v452
    %v929 = vpop.f32.mrf.mxu0
    %v930 = vadd.f32 %v826, %v929
    %v931 = vpop.f32.mrf.mxu0
    %v932 = vadd.f32 %v828, %v931
    %933 = vmatmul.bf16.gmra.mxu0 %v455
    %v934 = vpop.f32.mrf.mxu0
    %v935 = vadd.f32 %v831, %v934
    %v936 = vpop.f32.mrf.mxu0
    %v937 = vadd.f32 %v833, %v936
    %938 = vmatmul.bf16.gmra.mxu0 %v458
    %v939 = vpop.f32.mrf.mxu0
    %v940 = vadd.f32 %v836, %v939
    %v941 = vpop.f32.mrf.mxu0
    %v942 = vadd.f32 %v838, %v941
    %943 = vmatmul.bf16.gmra.mxu0 %v461
    %v944 = vpop.f32.mrf.mxu0
    %v945 = vadd.f32 %v841, %v944
    %v946 = vpop.f32.mrf.mxu0
    %v947 = vadd.f32 %v843, %v946
    %948 = vmatmul.bf16.gmra.mxu0 %v464
    %v949 = vpop.f32.mrf.mxu0
    %v950 = vadd.f32 %v846, %v949
    %v951 = vpop.f32.mrf.mxu0
    %v952 = vadd.f32 %v848, %v951
    %953 = vmatmul.bf16.gmra.mxu0 %v467
    %v954 = vpop.f32.mrf.mxu0
    %v955 = vadd.f32 %v851, %v954
    %v956 = vpop.f32.mrf.mxu0
    %v957 = vadd.f32 %v853, %v956
    %958 = vmatmul.bf16.gmra.mxu0 %v470
    %v959 = vpop.f32.mrf.mxu0
    %v960 = vadd.f32 %v856, %v959
    %v961 = vpop.f32.mrf.mxu0
    %v962 = vadd.f32 %v858, %v961
    %963 = vmatmul.bf16.gmra.mxu0 %v473
    %v964 = vpop.f32.mrf.mxu0
    %v965 = vadd.f32 %v861, %v964
    %v966 = vpop.f32.mrf.mxu0
    %v967 = vadd.f32 %v863, %v966
    %968 = vmatmul.bf16.gmra.mxu0 %v476
    %v969 = vpop.f32.mrf.mxu0
    %v970 = vadd.f32 %v866, %v969
    %v971 = vpop.f32.mrf.mxu0
    %v972 = vadd.f32 %v868, %v971
    %973 = vmatmul.bf16.gmra.mxu0 %v479
    %v974 = vpop.f32.mrf.mxu0
    %v975 = vadd.f32 %v871, %v974
    %v976 = vpop.f32.mrf.mxu0
    %v977 = vadd.f32 %v873, %v976
    %978 = vmatmul.bf16.gmra.mxu0 %v482
    %v979 = vpop.f32.mrf.mxu0
    %v980 = vadd.f32 %v876, %v979
    %v981 = vpop.f32.mrf.mxu0
    %v982 = vadd.f32 %v878, %v981
    %983 = vmatmul.bf16.gmra.mxu0 %v485
    %v984 = vpop.f32.mrf.mxu0
    %v985 = vadd.f32 %v881, %v984
    %v986 = vpop.f32.mrf.mxu0
    %v987 = vadd.f32 %v883, %v986
    %988 = vmatmul.bf16.gmra.mxu0 %v488
    %v989 = vpop.f32.mrf.mxu0
    %v990 = vadd.f32 %v886, %v989
    %v991 = vpop.f32.mrf.mxu0
    %v992 = vadd.f32 %v888, %v991
    %993 = vmatmul.bf16.gmra.mxu0 %v491
    %v994 = vpop.f32.mrf.mxu0
    %v995 = vadd.f32 %v891, %v994
    %v996 = vpop.f32.mrf.mxu0
    %v997 = vadd.f32 %v893, %v996
    %998 = vmatmul.bf16.gmra.mxu0 %v494
    %v999 = vpop.f32.mrf.mxu0
    %v1000 = vadd.f32 %v896, %v999
    %v1001 = vpop.f32.mrf.mxu0
    %v1002 = vadd.f32 %v898, %v1001
    %1003 = vmatmul.bf16.gmra.mxu0 %v497
    %v1004 = vpop.f32.mrf.mxu0
    %v1005 = vadd.f32 %v901, %v1004
    %v1006 = vpop.f32.mrf.mxu0
    %v1007 = vadd.f32 %v903, %v1006
    %1008 = vmatmul.bf16.gmra.mxu0 %v500
    %v1009 = vpop.f32.mrf.mxu0
    %v1010 = vadd.f32 %v906, %v1009
    %v1011 = vpop.f32.mrf.mxu0
    %v1012 = vadd.f32 %v908, %v1011
    %1013 = vdwg.mxu0
    %v1014 = vadd.f32 %v92, %v920
    %v1015 = vadd.f32 %v93, %v922
    %v1016 = vadd.f32 %v94, %v925
    %v1017 = vadd.f32 %v95, %v927
    %v1018 = vadd.f32 %v96, %v930
    %v1019 = vadd.f32 %v97, %v932
    %v1020 = vadd.f32 %v98, %v935
    %v1021 = vadd.f32 %v99, %v937
    %v1022 = vadd.f32 %v100, %v940
    %v1023 = vadd.f32 %v101, %v942
    %v1024 = vadd.f32 %v102, %v945
    %v1025 = vadd.f32 %v103, %v947
    %v1026 = vadd.f32 %v104, %v950
    %v1027 = vadd.f32 %v105, %v952
    %v1028 = vadd.f32 %v106, %v955
    %v1029 = vadd.f32 %v107, %v957
    %v1030 = vadd.f32 %v108, %v960
    %v1031 = vadd.f32 %v109, %v962
    %v1032 = vadd.f32 %v110, %v965
    %v1033 = vadd.f32 %v111, %v967
    %v1034 = vadd.f32 %v112, %v970
    %v1035 = vadd.f32 %v113, %v972
    %v1036 = vadd.f32 %v114, %v975
    %v1037 = vadd.f32 %v115, %v977
    %v1038 = vadd.f32 %v116, %v980
    %v1039 = vadd.f32 %v117, %v982
    %v1040 = vadd.f32 %v118, %v985
    %v1041 = vadd.f32 %v119, %v987
    %v1042 = vadd.f32 %v120, %v990
    %v1043 = vadd.f32 %v121, %v992
    %v1044 = vadd.f32 %v122, %v995
    %v1045 = vadd.f32 %v123, %v997
    %v1046 = vadd.f32 %v124, %v1000
    %v1047 = vadd.f32 %v125, %v1002
    %v1048 = vadd.f32 %v126, %v1005
    %v1049 = vadd.f32 %v127, %v1007
    %v1050 = vadd.f32 %v128, %v1010
    %v1051 = vadd.f32 %v129, %v1012
    %1052 = vst [vmem:[#allocation7] sm:$0xff] %v1014
    %1053 = vst [vmem:[#allocation7 + $0x8] sm:$0xff] %v1015
    %1054 = vst [vmem:[#allocation7 + $0x10] sm:$0xff] %v1016
    %1055 = vst [vmem:[#allocation7 + $0x18] sm:$0xff] %v1017
    %1056 = vst [vmem:[#allocation7 + $0x20] sm:$0xff] %v1018
    %1057 = vst [vmem:[#allocation7 + $0x28] sm:$0xff] %v1019
    %1058 = vst [vmem:[#allocation7 + $0x30] sm:$0xff] %v1020
    %1059 = vst [vmem:[#allocation7 + $0x38] sm:$0xff] %v1021
    %1060 = vst [vmem:[#allocation7 + $0x40] sm:$0xff] %v1022
    %1061 = vst [vmem:[#allocation7 + $0x48] sm:$0xff] %v1023
    %1062 = vst [vmem:[#allocation7 + $0x50] sm:$0xff] %v1024
    %1063 = vst [vmem:[#allocation7 + $0x58] sm:$0xff] %v1025
    %1064 = vst [vmem:[#allocation7 + $0x60] sm:$0xff] %v1026
    %1065 = vst [vmem:[#allocation7 + $0x68] sm:$0xff] %v1027
    %1066 = vst [vmem:[#allocation7 + $0x70] sm:$0xff] %v1028
    %1067 = vst [vmem:[#allocation7 + $0x78] sm:$0xff] %v1029
    %1068 = vst [vmem:[#allocation7 + $0x80] sm:$0xff] %v1030
    %1069 = vst [vmem:[#allocation7 + $0x88] sm:$0xff] %v1031
    %1070 = vst [vmem:[#allocation7 + $0x90] sm:$0xff] %v1032
    %1071 = vst [vmem:[#allocation7 + $0x98] sm:$0xff] %v1033
    %1072 = vst [vmem:[#allocation7 + $0xa0] sm:$0xff] %v1034
    %1073 = vst [vmem:[#allocation7 + $0xa8] sm:$0xff] %v1035
    %1074 = vst [vmem:[#allocation7 + $0xb0] sm:$0xff] %v1036
    %1075 = vst [vmem:[#allocation7 + $0xb8] sm:$0xff] %v1037
    %1076 = vst [vmem:[#allocation7 + $0xc0] sm:$0xff] %v1038
    %1077 = vst [vmem:[#allocation7 + $0xc8] sm:$0xff] %v1039
    %1078 = vst [vmem:[#allocation7 + $0xd0] sm:$0xff] %v1040
    %1079 = vst [vmem:[#allocation7 + $0xd8] sm:$0xff] %v1041
    %1080 = vst [vmem:[#allocation7 + $0xe0] sm:$0xff] %v1042
    %1081 = vst [vmem:[#allocation7 + $0xe8] sm:$0xff] %v1043
    %1082 = vst [vmem:[#allocation7 + $0xf0] sm:$0xff] %v1044
    %1083 = vst [vmem:[#allocation7 + $0xf8] sm:$0xff] %v1045
    %1084 = vst [vmem:[#allocation7 + $0x100] sm:$0xff] %v1046
    %1085 = vst [vmem:[#allocation7 + $0x108] sm:$0xff] %v1047
    %1086 = vst [vmem:[#allocation7 + $0x110] sm:$0xff] %v1048
    %1087 = vst [vmem:[#allocation7 + $0x118] sm:$0xff] %v1049
    %1088 = vst [vmem:[#allocation7 + $0x120] sm:$0xff] %v1050
    %1089 = vst [vmem:[#allocation7 + $0x128] sm:$0xff] %v1051
    // Predicated region
    $region30: #{tpu_custom_call.1} parent=1 // pred_check
      %p1090 = pneg %p50
    $region31: #{tpu_custom_call.1} parent=1 // pred_check_branch
      %1092 = sbr.rel (%p1090) target = $region33
    $region32: #{tpu_custom_call.1} parent=1 // pred_region
      %v1093 = vld [vmem:[#allocation7] sm:$0xff]
      %v1094 = vld [vmem:[#allocation7 + $0x8] sm:$0xff]
      %v1095 = vld [vmem:[#allocation7 + $0x10] sm:$0xff]
      %v1096 = vld [vmem:[#allocation7 + $0x18] sm:$0xff]
      %v1097 = vld [vmem:[#allocation7 + $0x20] sm:$0xff]
      %v1098 = vld [vmem:[#allocation7 + $0x28] sm:$0xff]
      %v1099 = vld [vmem:[#allocation7 + $0x30] sm:$0xff]
      %v1100 = vld [vmem:[#allocation7 + $0x38] sm:$0xff]
      %v1101 = vld [vmem:[#allocation7 + $0x40] sm:$0xff]
      %v1102 = vld [vmem:[#allocation7 + $0x48] sm:$0xff]
      %v1103 = vld [vmem:[#allocation7 + $0x50] sm:$0xff]
      %v1104 = vld [vmem:[#allocation7 + $0x58] sm:$0xff]
      %v1105 = vld [vmem:[#allocation7 + $0x60] sm:$0xff]
      %v1106 = vld [vmem:[#allocation7 + $0x68] sm:$0xff]
      %v1107 = vld [vmem:[#allocation7 + $0x70] sm:$0xff]
      %v1108 = vld [vmem:[#allocation7 + $0x78] sm:$0xff]
      %v1109 = vld [vmem:[#allocation7 + $0x80] sm:$0xff]
      %v1110 = vld [vmem:[#allocation7 + $0x88] sm:$0xff]
      %v1111 = vld [vmem:[#allocation7 + $0x90] sm:$0xff]
      %v1112 = vld [vmem:[#allocation7 + $0x98] sm:$0xff]
      %v1113 = vld [vmem:[#allocation7 + $0xa0] sm:$0xff]
      %v1114 = vld [vmem:[#allocation7 + $0xa8] sm:$0xff]
      %v1115 = vld [vmem:[#allocation7 + $0xb0] sm:$0xff]
      %v1116 = vld [vmem:[#allocation7 + $0xb8] sm:$0xff]
      %v1117 = vld [vmem:[#allocation7 + $0xc0] sm:$0xff]
      %v1118 = vld [vmem:[#allocation7 + $0xc8] sm:$0xff]
      %v1119 = vld [vmem:[#allocation7 + $0xd0] sm:$0xff]
      %v1120 = vld [vmem:[#allocation7 + $0xd8] sm:$0xff]
      %v1121 = vld [vmem:[#allocation7 + $0xe0] sm:$0xff]
      %v1122 = vld [vmem:[#allocation7 + $0xe8] sm:$0xff]
      %v1123 = vld [vmem:[#allocation7 + $0xf0] sm:$0xff]
      %v1124 = vld [vmem:[#allocation7 + $0xf8] sm:$0xff]
      %v1125 = vld [vmem:[#allocation7 + $0x100] sm:$0xff]
      %v1126 = vld [vmem:[#allocation7 + $0x108] sm:$0xff]
      %v1127 = vld [vmem:[#allocation7 + $0x110] sm:$0xff]
      %v1128 = vld [vmem:[#allocation7 + $0x118] sm:$0xff]
      %v1129 = vld [vmem:[#allocation7 + $0x120] sm:$0xff]
      %v1130 = vld [vmem:[#allocation7 + $0x128] sm:$0xff]
      %v1131 = vld [vmem:[%s2] sm:$0x1]
      %v1132 = vld [vmem:[%s3] sm:$0x1]
      %v1134 = vperm.slane %v1131, 0
      %v1136 = vmul.f32 %v1093, %v1134
      %v1137 = vmul.f32 %v1094, %v1134
      %v1138 = vmul.f32 %v1095, %v1134
      %v1139 = vmul.f32 %v1096, %v1134
      %v1140 = vmul.f32 %v1097, %v1134
      %v1141 = vmul.f32 %v1098, %v1134
      %v1142 = vmul.f32 %v1099, %v1134
      %v1143 = vmul.f32 %v1100, %v1134
      %v1144 = vmul.f32 %v1101, %v1134
      %v1145 = vmul.f32 %v1102, %v1134
      %v1146 = vmul.f32 %v1103, %v1134
      %v1147 = vmul.f32 %v1104, %v1134
      %v1148 = vmul.f32 %v1105, %v1134
      %v1149 = vmul.f32 %v1106, %v1134
      %v1150 = vmul.f32 %v1107, %v1134
      %v1151 = vmul.f32 %v1108, %v1134
      %v1152 = vmul.f32 %v1109, %v1134
      %v1153 = vmul.f32 %v1110, %v1134
      %v1154 = vmul.f32 %v1111, %v1134
      %v1155 = vmul.f32 %v1112, %v1134
      %v1156 = vmul.f32 %v1113, %v1134
      %v1157 = vmul.f32 %v1114, %v1134
      %v1158 = vmul.f32 %v1115, %v1134
      %v1159 = vmul.f32 %v1116, %v1134
      %v1160 = vmul.f32 %v1117, %v1134
      %v1161 = vmul.f32 %v1118, %v1134
      %v1162 = vmul.f32 %v1119, %v1134
      %v1163 = vmul.f32 %v1120, %v1134
      %v1164 = vmul.f32 %v1121, %v1134
      %v1165 = vmul.f32 %v1122, %v1134
      %v1166 = vmul.f32 %v1123, %v1134
      %v1167 = vmul.f32 %v1124, %v1134
      %v1168 = vmul.f32 %v1125, %v1134
      %v1169 = vmul.f32 %v1126, %v1134
      %v1170 = vmul.f32 %v1127, %v1134
      %v1171 = vmul.f32 %v1128, %v1134
      %v1172 = vmul.f32 %v1129, %v1134
      %v1173 = vmul.f32 %v1130, %v1134
      %v1175 = vperm.slane %v1132, 0
      %v1177 = vadd.f32 %v1136, %v1175
      %v1178 = vadd.f32 %v1137, %v1175
      %v1179 = vadd.f32 %v1138, %v1175
      %v1180 = vadd.f32 %v1139, %v1175
      %v1181 = vadd.f32 %v1140, %v1175
      %v1182 = vadd.f32 %v1141, %v1175
      %v1183 = vadd.f32 %v1142, %v1175
      %v1184 = vadd.f32 %v1143, %v1175
      %v1185 = vadd.f32 %v1144, %v1175
      %v1186 = vadd.f32 %v1145, %v1175
      %v1187 = vadd.f32 %v1146, %v1175
      %v1188 = vadd.f32 %v1147, %v1175
      %v1189 = vadd.f32 %v1148, %v1175
      %v1190 = vadd.f32 %v1149, %v1175
      %v1191 = vadd.f32 %v1150, %v1175
      %v1192 = vadd.f32 %v1151, %v1175
      %v1193 = vadd.f32 %v1152, %v1175
      %v1194 = vadd.f32 %v1153, %v1175
      %v1195 = vadd.f32 %v1154, %v1175
      %v1196 = vadd.f32 %v1155, %v1175
      %v1197 = vadd.f32 %v1156, %v1175
      %v1198 = vadd.f32 %v1157, %v1175
      %v1199 = vadd.f32 %v1158, %v1175
      %v1200 = vadd.f32 %v1159, %v1175
      %v1201 = vadd.f32 %v1160, %v1175
      %v1202 = vadd.f32 %v1161, %v1175
      %v1203 = vadd.f32 %v1162, %v1175
      %v1204 = vadd.f32 %v1163, %v1175
      %v1205 = vadd.f32 %v1164, %v1175
      %v1206 = vadd.f32 %v1165, %v1175
      %v1207 = vadd.f32 %v1166, %v1175
      %v1208 = vadd.f32 %v1167, %v1175
      %v1209 = vadd.f32 %v1168, %v1175
      %v1210 = vadd.f32 %v1169, %v1175
      %v1211 = vadd.f32 %v1170, %v1175
      %v1212 = vadd.f32 %v1171, %v1175
      %v1213 = vadd.f32 %v1172, %v1175
      %v1214 = vadd.f32 %v1173, %v1175
      %vm1215 = vcmp.ge.f32.partialorder %v1177, 0.0
      %vm1216 = vcmp.ge.f32.partialorder %v1178, 0.0
      %vm1217 = vcmp.ge.f32.partialorder %v1179, 0.0
      %vm1218 = vcmp.ge.f32.partialorder %v1180, 0.0
      %vm1219 = vcmp.ge.f32.partialorder %v1181, 0.0
      %vm1220 = vcmp.ge.f32.partialorder %v1182, 0.0
      %vm1221 = vcmp.ge.f32.partialorder %v1183, 0.0
      %vm1222 = vcmp.ge.f32.partialorder %v1184, 0.0
      %vm1223 = vcmp.ge.f32.partialorder %v1185, 0.0
      %vm1224 = vcmp.ge.f32.partialorder %v1186, 0.0
      %vm1225 = vcmp.ge.f32.partialorder %v1187, 0.0
      %vm1226 = vcmp.ge.f32.partialorder %v1188, 0.0
      %vm1227 = vcmp.ge.f32.partialorder %v1189, 0.0
      %vm1228 = vcmp.ge.f32.partialorder %v1190, 0.0
      %vm1229 = vcmp.ge.f32.partialorder %v1191, 0.0
      %vm1230 = vcmp.ge.f32.partialorder %v1192, 0.0
      %vm1231 = vcmp.ge.f32.partialorder %v1193, 0.0
      %vm1232 = vcmp.ge.f32.partialorder %v1194, 0.0
      %vm1233 = vcmp.ge.f32.partialorder %v1195, 0.0
      %vm1234 = vcmp.ge.f32.partialorder %v1196, 0.0
      %vm1235 = vcmp.ge.f32.partialorder %v1197, 0.0
      %vm1236 = vcmp.ge.f32.partialorder %v1198, 0.0
      %vm1237 = vcmp.ge.f32.partialorder %v1199, 0.0
      %vm1238 = vcmp.ge.f32.partialorder %v1200, 0.0
      %vm1239 = vcmp.ge.f32.partialorder %v1201, 0.0
      %vm1240 = vcmp.ge.f32.partialorder %v1202, 0.0
      %vm1241 = vcmp.ge.f32.partialorder %v1203, 0.0
      %vm1242 = vcmp.ge.f32.partialorder %v1204, 0.0
      %vm1243 = vcmp.ge.f32.partialorder %v1205, 0.0
      %vm1244 = vcmp.ge.f32.partialorder %v1206, 0.0
      %vm1245 = vcmp.ge.f32.partialorder %v1207, 0.0
      %vm1246 = vcmp.ge.f32.partialorder %v1208, 0.0
      %vm1247 = vcmp.ge.f32.partialorder %v1209, 0.0
      %vm1248 = vcmp.ge.f32.partialorder %v1210, 0.0
      %vm1249 = vcmp.ge.f32.partialorder %v1211, 0.0
      %vm1250 = vcmp.ge.f32.partialorder %v1212, 0.0
      %vm1251 = vcmp.ge.f32.partialorder %v1213, 0.0
      %vm1252 = vcmp.ge.f32.partialorder %v1214, 0.0
      %v1253 = vmul.f32 %v1177, 0.01
      %v1254 = vmul.f32 %v1178, 0.01
      %v1255 = vmul.f32 %v1179, 0.01
      %v1256 = vmul.f32 %v1180, 0.01
      %v1257 = vmul.f32 %v1181, 0.01
      %v1258 = vmul.f32 %v1182, 0.01
      %v1259 = vmul.f32 %v1183, 0.01
      %v1260 = vmul.f32 %v1184, 0.01
      %v1261 = vmul.f32 %v1185, 0.01
      %v1262 = vmul.f32 %v1186, 0.01
      %v1263 = vmul.f32 %v1187, 0.01
      %v1264 = vmul.f32 %v1188, 0.01
      %v1265 = vmul.f32 %v1189, 0.01
      %v1266 = vmul.f32 %v1190, 0.01
      %v1267 = vmul.f32 %v1191, 0.01
      %v1268 = vmul.f32 %v1192, 0.01
      %v1269 = vmul.f32 %v1193, 0.01
      %v1270 = vmul.f32 %v1194, 0.01
      %v1271 = vmul.f32 %v1195, 0.01
      %v1272 = vmul.f32 %v1196, 0.01
      %v1273 = vmul.f32 %v1197, 0.01
      %v1274 = vmul.f32 %v1198, 0.01
      %v1275 = vmul.f32 %v1199, 0.01
      %v1276 = vmul.f32 %v1200, 0.01
      %v1277 = vmul.f32 %v1201, 0.01
      %v1278 = vmul.f32 %v1202, 0.01
      %v1279 = vmul.f32 %v1203, 0.01
      %v1280 = vmul.f32 %v1204, 0.01
      %v1281 = vmul.f32 %v1205, 0.01
      %v1282 = vmul.f32 %v1206, 0.01
      %v1283 = vmul.f32 %v1207, 0.01
      %v1284 = vmul.f32 %v1208, 0.01
      %v1285 = vmul.f32 %v1209, 0.01
      %v1286 = vmul.f32 %v1210, 0.01
      %v1287 = vmul.f32 %v1211, 0.01
      %v1288 = vmul.f32 %v1212, 0.01
      %v1289 = vmul.f32 %v1213, 0.01
      %v1290 = vmul.f32 %v1214, 0.01
      %v1291 = vsel %vm1215, %v1177, %v1253
      %v1292 = vsel %vm1216, %v1178, %v1254
      %v1293 = vsel %vm1217, %v1179, %v1255
      %v1294 = vsel %vm1218, %v1180, %v1256
      %v1295 = vsel %vm1219, %v1181, %v1257
      %v1296 = vsel %vm1220, %v1182, %v1258
      %v1297 = vsel %vm1221, %v1183, %v1259
      %v1298 = vsel %vm1222, %v1184, %v1260
      %v1299 = vsel %vm1223, %v1185, %v1261
      %v1300 = vsel %vm1224, %v1186, %v1262
      %v1301 = vsel %vm1225, %v1187, %v1263
      %v1302 = vsel %vm1226, %v1188, %v1264
      %v1303 = vsel %vm1227, %v1189, %v1265
      %v1304 = vsel %vm1228, %v1190, %v1266
      %v1305 = vsel %vm1229, %v1191, %v1267
      %v1306 = vsel %vm1230, %v1192, %v1268
      %v1307 = vsel %vm1231, %v1193, %v1269
      %v1308 = vsel %vm1232, %v1194, %v1270
      %v1309 = vsel %vm1233, %v1195, %v1271
      %v1310 = vsel %vm1234, %v1196, %v1272
      %v1311 = vsel %vm1235, %v1197, %v1273
      %v1312 = vsel %vm1236, %v1198, %v1274
      %v1313 = vsel %vm1237, %v1199, %v1275
      %v1314 = vsel %vm1238, %v1200, %v1276
      %v1315 = vsel %vm1239, %v1201, %v1277
      %v1316 = vsel %vm1240, %v1202, %v1278
      %v1317 = vsel %vm1241, %v1203, %v1279
      %v1318 = vsel %vm1242, %v1204, %v1280
      %v1319 = vsel %vm1243, %v1205, %v1281
      %v1320 = vsel %vm1244, %v1206, %v1282
      %v1321 = vsel %vm1245, %v1207, %v1283
      %v1322 = vsel %vm1246, %v1208, %v1284
      %v1323 = vsel %vm1247, %v1209, %v1285
      %v1324 = vsel %vm1248, %v1210, %v1286
      %v1325 = vsel %vm1249, %v1211, %v1287
      %v1326 = vsel %vm1250, %v1212, %v1288
      %v1327 = vsel %vm1251, %v1213, %v1289
      %v1328 = vsel %vm1252, %v1214, %v1290
      %1329 = vst [vmem:[#allocation7] sm:$0xff] %v1291
      %1330 = vst [vmem:[#allocation7 + $0x8] sm:$0xff] %v1292
      %1331 = vst [vmem:[#allocation7 + $0x10] sm:$0xff] %v1293
      %1332 = vst [vmem:[#allocation7 + $0x18] sm:$0xff] %v1294
      %1333 = vst [vmem:[#allocation7 + $0x20] sm:$0xff] %v1295
      %1334 = vst [vmem:[#allocation7 + $0x28] sm:$0xff] %v1296
      %1335 = vst [vmem:[#allocation7 + $0x30] sm:$0xff] %v1297
      %1336 = vst [vmem:[#allocation7 + $0x38] sm:$0xff] %v1298
      %1337 = vst [vmem:[#allocation7 + $0x40] sm:$0xff] %v1299
      %1338 = vst [vmem:[#allocation7 + $0x48] sm:$0xff] %v1300
      %1339 = vst [vmem:[#allocation7 + $0x50] sm:$0xff] %v1301
      %1340 = vst [vmem:[#allocation7 + $0x58] sm:$0xff] %v1302
      %1341 = vst [vmem:[#allocation7 + $0x60] sm:$0xff] %v1303
      %1342 = vst [vmem:[#allocation7 + $0x68] sm:$0xff] %v1304
      %1343 = vst [vmem:[#allocation7 + $0x70] sm:$0xff] %v1305
      %1344 = vst [vmem:[#allocation7 + $0x78] sm:$0xff] %v1306
      %1345 = vst [vmem:[#allocation7 + $0x80] sm:$0xff] %v1307
      %1346 = vst [vmem:[#allocation7 + $0x88] sm:$0xff] %v1308
      %1347 = vst [vmem:[#allocation7 + $0x90] sm:$0xff] %v1309
      %1348 = vst [vmem:[#allocation7 + $0x98] sm:$0xff] %v1310
      %1349 = vst [vmem:[#allocation7 + $0xa0] sm:$0xff] %v1311
      %1350 = vst [vmem:[#allocation7 + $0xa8] sm:$0xff] %v1312
      %1351 = vst [vmem:[#allocation7 + $0xb0] sm:$0xff] %v1313
      %1352 = vst [vmem:[#allocation7 + $0xb8] sm:$0xff] %v1314
      %1353 = vst [vmem:[#allocation7 + $0xc0] sm:$0xff] %v1315
      %1354 = vst [vmem:[#allocation7 + $0xc8] sm:$0xff] %v1316
      %1355 = vst [vmem:[#allocation7 + $0xd0] sm:$0xff] %v1317
      %1356 = vst [vmem:[#allocation7 + $0xd8] sm:$0xff] %v1318
      %1357 = vst [vmem:[#allocation7 + $0xe0] sm:$0xff] %v1319
      %1358 = vst [vmem:[#allocation7 + $0xe8] sm:$0xff] %v1320
      %1359 = vst [vmem:[#allocation7 + $0xf0] sm:$0xff] %v1321
      %1360 = vst [vmem:[#allocation7 + $0xf8] sm:$0xff] %v1322
      %1361 = vst [vmem:[#allocation7 + $0x100] sm:$0xff] %v1323
      %1362 = vst [vmem:[#allocation7 + $0x108] sm:$0xff] %v1324
      %1363 = vst [vmem:[#allocation7 + $0x110] sm:$0xff] %v1325
      %1364 = vst [vmem:[#allocation7 + $0x118] sm:$0xff] %v1326
      %1365 = vst [vmem:[#allocation7 + $0x120] sm:$0xff] %v1327
      %1366 = vst [vmem:[#allocation7 + $0x128] sm:$0xff] %v1328
    $region33: #{tpu_custom_call.1} parent=1 // pred_fallthru
      _
    // Predicated region
    $region34: #{tpu_custom_call.1} parent=1 // pred_check
      _
    $region35: #{tpu_custom_call.1} parent=1 // pred_check_branch
      %1368 = sbr.rel (0) target = $region37
    $region36: #{tpu_custom_call.1} parent=1 // pred_region
      %1370 = vsyncadd [#allocation4], 0
      %s1371 = sshll.u32 [#allocation7], 4
      %s1372 = int_to_ptr.vmem [resolvable:$true] %s1371
      %s1373 = sshll.u32 %s4, 4
      %s1374 = int_to_ptr.hbm [resolvable:$true] %s1373
      %1379 = dma.vmem_to_hbm [thread:$0]  %s1372, 4864, %s1374, [#allocation4], 128, 128, 8
    $region37: #{tpu_custom_call.1} parent=1 // pred_fallthru
      _
    // Predicated region
    $region38: #{tpu_custom_call.1} parent=1 // pred_check
      _
    $region39: #{tpu_custom_call.1} parent=1 // pred_check_branch
      %1381 = sbr.rel (0) target = $region41
    $region40: #{tpu_custom_call.1} parent=1 // pred_region
      %1383 = dma.done [#allocation4], 4864
    $region41: #{tpu_custom_call.1} parent=1 // pred_fallthru
      _
    %1384 = vsyncpa [#allocation3], 1
    %1385 = vsyncpa [#allocation6], 1
    %1386 = vsyncpa [#allocation4], 1

</llo_original>
